<compile_context>
chip_gen: v7x
topology: tpu7x:2x2x1
jax: 0.10.0
libtpu: 0.0.40
codegen_flags: <defaults>
</compile_context>

<pallas_src>
import functools

import jax
import jax.numpy as jnp
from jax import lax
from jax.experimental import pallas as pl
from jax.experimental.pallas import tpu as pltpu


# ----------------------------- generation helpers -----------------------------

def _device_kind() -> str:
    try:
        return jax.devices()[0].device_kind.lower()
    except Exception:  # pragma: no cover - defensive
        return ""


def _vmem_limit_bytes(kind: str) -> int:
    if "v7" in kind:
        return 40 * 1024 * 1024        # v7x: 64 MiB physical per TensorCore
    if "v5" in kind or "v6" in kind:
        return 96 * 1024 * 1024        # 128 MiB physical on v5e/v6e
    return 32 * 1024 * 1024            # safe default for unknown generations


def _choose_tile_q(n: int, c: int, ckv: int, cq: int, vmem_limit: int) -> int:
    """Largest 128-aligned query tile that fits the VMEM budget (>=2 tiles/batch)."""
    # per-batch residents: x block (f32, double-buffered), K|V scratch (bf16),
    # f32 projection temporary at tile 0, K|V weights (bf16).
    resident = 2 * c * n * 4 + ckv * n * 2 + ckv * n * 4 + ckv * c * 2
    budget = int(0.75 * vmem_limit) - resident
    for tq in (1024, 512, 256, 128):
        if tq > n or n % tq != 0 or n // tq < 2:
            continue
        # per-tile: scores f32 + p bf16, out (double-buffered) + o_un f32, qT tile bf16 x2
        per_tile = tq * n * 6 + 3 * tq * c * 4 + 2 * tq * cq * 2
        if per_tile <= budget:
            return tq
    return 128 if n % 128 == 0 else n


# ----------------------------- Pallas kernel -----------------------------

def _self_attention_kernel(gamma_ref, x_ref, qt_ref, w_ref, b_ref, o_ref, kv_ref,
                           *, cq: int, bf16_exp: bool):
    """grid = (batch, query_tile).  Channels-first blocks:
         x_ref   (1, C, N)   f32   -- resident across the query-tile axis
         qt_ref  (1, TQ, CQ) bf16  -- this tile's pre-projected queries
         w_ref   (CQ+C, C)   bf16  -- concatenated [Wk; Wv]
         b_ref   (CQ+C, 1)   f32   -- concatenated [bk; bv]
         o_ref   (1, C, TQ)  f32
         kv_ref  (CQ+C, N)   bf16  VMEM scratch (per-batch K|V)
    """
    t = pl.program_id(1)
    tq = o_ref.shape[2]
    n = x_ref.shape[2]

    # Project K|V for the whole batch element once (first query tile only):
    # one wide (CQ+C, C) x (C, N) MXU matmul, f32 accumulate, bias, cast to bf16.
    @pl.when(t == 0)
    def _():
        xb = x_ref[0].astype(jnp.bfloat16)                                    # (C, N)
        kv = jnp.dot(w_ref[...], xb, preferred_element_type=jnp.float32)
        kv_ref[...] = (kv + b_ref[...]).astype(jnp.bfloat16)

    q = qt_ref[0]                                  # (TQ, CQ) bf16
    k = kv_ref[0:cq, :]                            # (CQ, N)  bf16
    v = kv_ref[cq:, :]                             # (C,  N)  bf16

    # s[i, j] = q_i . k_j  -- plain NN MXU matmul, no transposes anywhere.
    s = jnp.dot(q, k, preferred_element_type=jnp.float32)                     # (TQ, N) f32

    # numerically-stable softmax over the key axis (lanes)
    m = jnp.max(s, axis=-1, keepdims=True)                                    # (TQ, 1)
    if bf16_exp:
        p = jnp.exp((s - m).astype(jnp.bfloat16))        # bf16 EUP exp (v6e/v7x)
    else:
        p = jnp.exp(s - m).astype(jnp.bfloat16)          # f32 exp on v5e (no bf16 EUP)

    # Row-sums of p, laid out along lanes ((1, TQ)) via a tiny ones-row MXU matmul
    # (f32 accumulation) so no (TQ,1)->(1,TQ) relayout is needed.
    ones8 = jnp.ones((8, n), jnp.bfloat16)
    l_row = lax.dot_general(ones8, p, (((1,), (1,)), ((), ())),
                            preferred_element_type=jnp.float32)[0:1, :]       # (1, TQ)

    # Deferred softmax normalization: un-normalized V.P^T first, then one (1, TQ)
    # scale that also folds in gamma (C*TQ multiplies instead of N*TQ).
    o_un = lax.dot_general(v, p, (((1,), (1,)), ((), ())),
                           preferred_element_type=jnp.float32)                # (C, TQ)
    scale = gamma_ref[0, 0] * pl.reciprocal(l_row, approx=True)               # (1, TQ)

    col0 = pl.multiple_of(t * tq, tq)
    x_tile = x_ref[0, :, pl.ds(col0, tq)]          # residual slice read at point of use
    o_ref[0] = (o_un * scale + x_tile).astype(o_ref.dtype)


# ----------------------------- wrapper -----------------------------

def self_attention_3d(x, params, *, tile_q=None):
    """Forward of SelfAttention3D. x: (B, C, D, H, W) f32 -> (B, C, D, H, W) f32."""
    B, C, D, H, W = x.shape
    assert C % 8 == 0, "in_channels must be divisible by 8 (module uses C // 8)"
    N = D * H * W
    CQ = C // 8
    CKV = CQ + C

    # Channels-first token matrix: a pure view of the NCDHW layout (no transpose),
    # and the kernel also produces (B, C, N), so no transpose on the way out either.
    xf = x.astype(jnp.float32).reshape(B, C, N)

    # torch Conv3d(cin, cout, 1) weight (cout, cin, 1, 1, 1) -> (cout, cin).
    wq = params["query"]["w"].reshape(CQ, C)
    wk = params["key"]["w"].reshape(CQ, C)
    wv = params["value"]["w"].reshape(C, C)

    # Q is narrow (C/8): pre-project it channels-last (B, N, CQ) so every in-kernel
    # dot stays in a standard NN / NT MXU form (no transposed-LHS matmuls).
    qT = jnp.einsum("bcn,oc->bno", xf.astype(jnp.bfloat16), wq.astype(jnp.bfloat16),
                    preferred_element_type=jnp.float32)
    qT = (qT + params["query"]["b"][None, None, :]).astype(jnp.bfloat16)      # (B, N, CQ)

    # K|V share one wide matmul inside the kernel (K alone is only CQ lanes wide).
    w_kv = jnp.concatenate([wk, wv], axis=0).astype(jnp.bfloat16)             # (CKV, C)
    b_kv = jnp.concatenate([params["key"]["b"], params["value"]["b"]],
                           axis=0).reshape(CKV, 1).astype(jnp.float32)        # (CKV, 1)
    gamma = params["gamma"].reshape(1, 1).astype(jnp.float32)

    kind = _device_kind()
    vmem_limit = _vmem_limit_bytes(kind)
    TQ = tile_q if tile_q is not None else _choose_tile_q(N, C, CKV, CQ, vmem_limit)
    assert N % TQ == 0
    n_tiles = N // TQ

    kernel = functools.partial(_self_attention_kernel, cq=CQ,
                               bf16_exp=("v5" not in kind))

    out = pl.pallas_call(
        kernel,
        out_shape=jax.ShapeDtypeStruct((B, C, N), jnp.float32),
        grid_spec=pltpu.PrefetchScalarGridSpec(
            num_scalar_prefetch=0,
            grid=(B, n_tiles),
            in_specs=[
                pl.BlockSpec(memory_space=pltpu.MemorySpace.SMEM),        # gamma (1,1)
                pl.BlockSpec((1, C, N), lambda b, t: (b, 0, 0)),          # x: one DMA / batch
                pl.BlockSpec((1, TQ, CQ), lambda b, t: (b, t, 0)),        # qT tile
                pl.BlockSpec((CKV, C), lambda b, t: (0, 0)),              # [Wk; Wv]
                pl.BlockSpec((CKV, 1), lambda b, t: (0, 0)),              # [bk; bv]
            ],
            out_specs=pl.BlockSpec((1, C, TQ), lambda b, t: (b, 0, t)),
            scratch_shapes=[pltpu.VMEM((CKV, N), jnp.bfloat16)],          # per-batch K|V
        ),
        compiler_params=pltpu.CompilerParams(
            # batch axis shards across TensorCores (v7x megacore); the query-tile
            # axis carries the per-batch K|V scratch so it stays "arbitrary".
            dimension_semantics=("parallel", "arbitrary"),
            vmem_limit_bytes=vmem_limit,
        ),
    )(gamma, xf, qT, w_kv, b_kv)

    return out.reshape(B, C, D, H, W)


# ----------------------------- pure-JAX reference (f32) -----------------------------

def self_attention_3d_reference(x, params):
    B, C, D, H, W = x.shape
    N = D * H * W
    CQ = C // 8
    xf = x.reshape(B, C, N).astype(jnp.float32)
    wq = params["query"]["w"].reshape(CQ, C)
    wk = params["key"]["w"].reshape(CQ, C)
    wv = params["value"]["w"].reshape(C, C)
    q = jnp.einsum("oc,bcn->bon", wq, xf) + params["query"]["b"][None, :, None]
    k = jnp.einsum("oc,bcn->bon", wk, xf) + params["key"]["b"][None, :, None]
    v = jnp.einsum("oc,bcn->bon", wv, xf) + params["value"]["b"][None, :, None]
    att = jax.nn.softmax(jnp.einsum("bci,bcj->bij", q, k), axis=2)
    out = jnp.einsum("bcj,bij->bci", v, att).reshape(B, C, D, H, W)
    return params["gamma"].reshape(()) * out + x


# ----------------------------- params & demo -----------------------------

def init_params(key, in_channels):
    cq = in_channels // 8
    kq, kk, kv, kbq, kbk, kbv = jax.random.split(key, 6)

    def w(k, shape):
        return 0.05 * jax.random.normal(k, shape, jnp.float32)

    def b(k, n):
        return 0.01 * jax.random.normal(k, (n,), jnp.float32)

    return {
        "query": {"w": w(kq, (cq, in_channels, 1, 1, 1)), "b": b(kbq, cq)},
        "key":   {"w": w(kk, (cq, in_channels, 1, 1, 1)), "b": b(kbk, cq)},
        "value": {"w": w(kv, (in_channels, in_channels, 1, 1, 1)), "b": b(kbv, in_channels)},
        # torch initializes gamma = zeros(1); use a nonzero value so the attention
        # path is actually exercised by the numerical check.
        "gamma": jnp.array([0.5], jnp.float32),
    }


if __name__ == "__main__":
    B, C, D, H, W = 2, 128, 8, 8, 8        # small demo shape (C % 8 == 0 required)
    key = jax.random.PRNGKey(0)
    pkey, xkey = jax.random.split(key)
    params = init_params(pkey, C)
    x = jax.random.normal(xkey, (B, C, D, H, W), jnp.float32)

    fwd = jax.jit(self_attention_3d)
    out = fwd(x, params)
    jax.block_until_ready(out)

    assert out.shape == x.shape, out.shape
    ref = self_attention_3d_reference(x, params)
    max_err = float(jnp.max(jnp.abs(out - ref)))
    # bf16 MXU operands (f32 accumulation) -> loose tolerance vs. the f32 reference.
    assert jnp.allclose(out, ref, atol=5e-2, rtol=5e-2), f"max abs err {max_err}"
    print("KERNEL_OK")
</pallas_src>

<mosaic_0001>
module attributes {stable_mosaic.version = 11 : i64} {
  func.func @_self_attention_kernel(%arg0: i32, %arg1: i32, %arg2: memref<1x1xf32, #tpu.memory_space<smem>>, %arg3: memref<1x128x512xf32, #tpu.memory_space<vmem>>, %arg4: memref<1x256x16xbf16, #tpu.memory_space<vmem>>, %arg5: memref<144x128xbf16, #tpu.memory_space<vmem>>, %arg6: memref<144x1xf32, #tpu.memory_space<vmem>>, %arg7: memref<1x128x256xf32, #tpu.memory_space<vmem>>, %arg8: memref<144x512xbf16, #tpu.memory_space<vmem>>) attributes {dimension_semantics = [#tpu.dimension_semantics<parallel>, #tpu.dimension_semantics<arbitrary>], iteration_bounds = array<i64: 2, 2>, scalar_prefetch = 0 : i64, scratch_operands = 1 : i64, tpu.core_type = #tpu.core_type<tc>, window_params = [{transform_indices = @transform_0, window_bounds = array<i64: 1, 1>}, {transform_indices = @transform_1, window_bounds = array<i64: 1, 128, 512>}, {transform_indices = @transform_2, window_bounds = array<i64: 1, 256, 16>}, {pipeline_mode = #tpu.pipeline_mode<synchronous>, transform_indices = @transform_3, window_bounds = array<i64: 144, 128>}, {pipeline_mode = #tpu.pipeline_mode<synchronous>, transform_indices = @transform_4, window_bounds = array<i64: 144, 1>}, {transform_indices = @transform_5, window_bounds = array<i64: 1, 128, 256>}]} {
    %c0_i32 = arith.constant 0 : i32
    %0 = arith.cmpi eq, %arg1, %c0_i32 : i32
    %1 = arith.extui %0 : i1 to i32
    %c0_i32_0 = arith.constant 0 : i32
    %2 = arith.cmpi ne, %1, %c0_i32_0 : i32
    scf.if %2 {
      %c0_17 = arith.constant 0 : index
      %c0_18 = arith.constant 0 : index
      %c0_19 = arith.constant 0 : index
      %33 = vector.load %arg3[%c0_17, %c0_18, %c0_19] : memref<1x128x512xf32, #tpu.memory_space<vmem>>, vector<1x128x512xf32>
      %34 = vector.shape_cast %33 : vector<1x128x512xf32> to vector<128x512xf32>
      %35 = arith.truncf %34 : vector<128x512xf32> to vector<128x512xbf16>
      %c0_20 = arith.constant 0 : index
      %c0_21 = arith.constant 0 : index
      %36 = vector.load %arg5[%c0_20, %c0_21] : memref<144x128xbf16, #tpu.memory_space<vmem>>, vector<144x128xbf16>
      %cst_22 = arith.constant dense<0.000000e+00> : vector<144x512xf32>
      %37 = tpu.matmul %36, %35, %cst_22 {dimension_numbers = #tpu.dot_dimension_numbers<[1], [0], [0], [1], [0, 0, 1, 1], [], []>} : vector<144x128xbf16>, vector<128x512xbf16>, vector<144x512xf32> -> vector<144x512xf32>
      %c0_23 = arith.constant 0 : index
      %c0_24 = arith.constant 0 : index
      %38 = vector.load %arg6[%c0_23, %c0_24] : memref<144x1xf32, #tpu.memory_space<vmem>>, vector<144x1xf32>
      %39 = vector.broadcast %38 : vector<144x1xf32> to vector<144x512xf32>
      %40 = arith.addf %37, %39 : vector<144x512xf32>
      %41 = arith.truncf %40 : vector<144x512xf32> to vector<144x512xbf16>
      %c0_25 = arith.constant 0 : index
      %c0_26 = arith.constant 0 : index
      %42 = vector.load %arg8[%c0_25, %c0_26] : memref<144x512xbf16, #tpu.memory_space<vmem>>, vector<144x512xbf16>
      tpu.vector_store %arg8[%c0_25, %c0_26], %41 {strides = array<i32>} : memref<144x512xbf16, #tpu.memory_space<vmem>>, vector<144x512xbf16>,
    } else {
    }
    %c0 = arith.constant 0 : index
    %c0_1 = arith.constant 0 : index
    %c0_2 = arith.constant 0 : index
    %3 = vector.load %arg4[%c0, %c0_1, %c0_2] : memref<1x256x16xbf16, #tpu.memory_space<vmem>>, vector<1x256x16xbf16>
    %4 = vector.shape_cast %3 : vector<1x256x16xbf16> to vector<256x16xbf16>
    %c0_3 = arith.constant 0 : index
    %c0_4 = arith.constant 0 : index
    %5 = vector.load %arg8[%c0_3, %c0_4] : memref<144x512xbf16, #tpu.memory_space<vmem>>, vector<16x512xbf16>
    %c16 = arith.constant 16 : index
    %c0_5 = arith.constant 0 : index
    %6 = vector.load %arg8[%c16, %c0_5] : memref<144x512xbf16, #tpu.memory_space<vmem>>, vector<128x512xbf16>
    %cst = arith.constant dense<0.000000e+00> : vector<256x512xf32>
    %7 = tpu.matmul %4, %5, %cst {dimension_numbers = #tpu.dot_dimension_numbers<[1], [0], [0], [1], [0, 0, 1, 1], [], []>} : vector<256x16xbf16>, vector<16x512xbf16>, vector<256x512xf32> -> vector<256x512xf32>
    %cst_6 = arith.constant dense<0xFF800000> : vector<256xf32>
    %8 = vector.multi_reduction <maximumf>, %7, %cst_6 [1] : vector<256x512xf32> to vector<256xf32>
    %9 = vector.shape_cast %8 : vector<256xf32> to vector<256x1xf32>
    %10 = vector.broadcast %9 : vector<256x1xf32> to vector<256x512xf32>
    %11 = arith.subf %7, %10 : vector<256x512xf32>
    %12 = arith.truncf %11 : vector<256x512xf32> to vector<256x512xbf16>
    %13 = math.exp %12 : vector<256x512xbf16>
    %cst_7 = arith.constant 1.000000e+00 : bf16
    %14 = vector.broadcast %cst_7 : bf16 to vector<8x512xbf16>
    %cst_8 = arith.constant dense<0.000000e+00> : vector<8x256xf32>
    %15 = tpu.matmul %14, %13, %cst_8 {dimension_numbers = #tpu.dot_dimension_numbers<[1], [1], [0], [0], [0, 0, 1, 0], [], []>} : vector<8x512xbf16>, vector<256x512xbf16>, vector<8x256xf32> -> vector<8x256xf32>
    %16 = vector.extract_strided_slice %15 {offsets = [0, 0], sizes = [1, 256], strides = [1, 1]} : vector<8x256xf32> to vector<1x256xf32>
    %cst_9 = arith.constant dense<0.000000e+00> : vector<128x256xf32>
    %17 = tpu.matmul %6, %13, %cst_9 {dimension_numbers = #tpu.dot_dimension_numbers<[1], [1], [0], [0], [0, 0, 1, 0], [], []>} : vector<128x512xbf16>, vector<256x512xbf16>, vector<128x256xf32> -> vector<128x256xf32>
    %c0_10 = arith.constant 0 : index
    %c0_11 = arith.constant 0 : index
    %18 = memref.load %arg2[%c0_10, %c0_11] : memref<1x1xf32, #tpu.memory_space<smem>>
    %19 = tpu.reciprocal %16 {approx = true} : vector<1x256xf32> -> vector<1x256xf32>
    %20 = vector.broadcast %18 : f32 to vector<1x256xf32>
    %21 = arith.mulf %20, %19 : vector<1x256xf32>
    %c256_i32 = arith.constant 256 : i32
    %22 = arith.muli %arg1, %c256_i32 : i32
    %23 = tpu.assume_multiple %22, 256 : i32
    %c0_12 = arith.constant 0 : index
    %c0_13 = arith.constant 0 : index
    %24 = arith.index_cast %23 : i32 to index
    %25 = vector.load %arg3[%c0_12, %c0_13, %24] : memref<1x128x512xf32, #tpu.memory_space<vmem>>, vector<1x128x256xf32>
    %26 = vector.shape_cast %25 : vector<1x128x256xf32> to vector<128x256xf32>
    %27 = vector.broadcast %21 : vector<1x256xf32> to vector<128x256xf32>
    %28 = arith.mulf %17, %27 : vector<128x256xf32>
    %29 = arith.addf %28, %26 : vector<128x256xf32>
    %c0_14 = arith.constant 0 : index
    %c0_15 = arith.constant 0 : index
    %c0_16 = arith.constant 0 : index
    %30 = vector.load %arg7[%c0_14, %c0_15, %c0_16] : memref<1x128x256xf32, #tpu.memory_space<vmem>>, vector<1x128x256xf32>
    %31 = vector.shape_cast %30 : vector<1x128x256xf32> to vector<128x256xf32>
    %32 = vector.shape_cast %29 : vector<128x256xf32> to vector<1x128x256xf32>
    tpu.vector_store %arg7[%c0_14, %c0_15, %c0_16], %32 {strides = array<i32>} : memref<1x128x256xf32, #tpu.memory_space<vmem>>, vector<1x128x256xf32>,
    return
  }
  func.func @transform_0(%arg0: i32, %arg1: i32) -> (i32, i32) {
    %c0_i32 = arith.constant 0 : i32
    %c0_i32_0 = arith.constant 0 : i32
    %c0_i32_1 = arith.constant 0 : i32
    return %c0_i32, %c0_i32_0 : i32, i32
  }
  func.func @transform_1(%arg0: i32, %arg1: i32) -> (i32, i32, i32) {
    %c0_i32 = arith.constant 0 : i32
    %c0_i32_0 = arith.constant 0 : i32
    %c0_i32_1 = arith.constant 0 : i32
    return %arg0, %c0_i32, %c0_i32_0 : i32, i32, i32
  }
  func.func @transform_2(%arg0: i32, %arg1: i32) -> (i32, i32, i32) {
    %c0_i32 = arith.constant 0 : i32
    %c0_i32_0 = arith.constant 0 : i32
    return %arg0, %arg1, %c0_i32 : i32, i32, i32
  }
  func.func @transform_3(%arg0: i32, %arg1: i32) -> (i32, i32) {
    %c0_i32 = arith.constant 0 : i32
    %c0_i32_0 = arith.constant 0 : i32
    %c0_i32_1 = arith.constant 0 : i32
    return %c0_i32, %c0_i32_0 : i32, i32
  }
  func.func @transform_4(%arg0: i32, %arg1: i32) -> (i32, i32) {
    %c0_i32 = arith.constant 0 : i32
    %c0_i32_0 = arith.constant 0 : i32
    %c0_i32_1 = arith.constant 0 : i32
    return %c0_i32, %c0_i32_0 : i32, i32
  }
  func.func @transform_5(%arg0: i32, %arg1: i32) -> (i32, i32, i32) {
    %c0_i32 = arith.constant 0 : i32
    %c0_i32_0 = arith.constant 0 : i32
    return %arg0, %c0_i32, %arg1 : i32, i32, i32
  }
}

</mosaic_0001>

<llo_original>
// kernel: self_attention_3d.1
$region0: #{self_attention_3d.1}
  #allocation0 [shape = 'u32[]', space=smem, size = 0x4, offset = 0x4, fixed_abs, tag = 'smem constant byte address 0x4 - core index']
  #allocation1 [shape = 'u32[144,128]{1,0:T(1,128)}', space=vmem, size = 0x12000, scoped, tag = 'internal scratch']
  #allocation2 [shape = 'bf16[144,512]{1,0:T(16,128)(2,1)}', space=vmem, size = 0x24000, scoped, tag = 'scratch operand']
  #allocation3 [shape = 'f32[1,1]{1,0:T(1,128)S(6)}', space=smem, size = 0x200, scoped, tag = 'scoped memory for self_attention_3d.1']
  %s0 = inlined_call_operand.<no memory space> [shape: f32[1,1], index: 0, kind: input, shape index: {}]
  %s1 = inlined_call_operand.vmem [shape: f32[2,128,512], index: 1, kind: input, shape index: {}]
  %s2 = inlined_call_operand.vmem [shape: bf16[2,512,16], index: 2, kind: input, shape index: {}]
  %s3 = inlined_call_operand.vmem [shape: bf16[144,128], index: 3, kind: input, shape index: {}]
  %s4 = inlined_call_operand.vmem [shape: f32[144,1], index: 4, kind: input, shape index: {}]
  %s5 = inlined_call_operand.vmem [shape: f32[2,128,512], index: 5, kind: output, shape index: {}]
  %s6 = sld [smem:[#allocation0]]
  $region76: #{self_attention_3d.1} parent=0
    _
  %s8 = ssub.s32 1, %s6
  %s9 = scalar_select 0, %s8, %s6
  %10 = sst [smem:[#allocation3]] %s0
  $region1: #{self_attention_3d.1} parent=0
    #allocation4 [shape = 'u8[262144]{0}', space=vmem, size = 0x40000, scoped, tag = 'output window, operand 0']
    loop: start=0, step=1, limit=6
    $region2: #{self_attention_3d.1} parent=1 // loop_pre_header
      _
    $region3: #{self_attention_3d.1} parent=1 // loop_header
      %s12 = sphi 0, %s16
      %p13 = scmp.ge.s32.totalorder %s12, 6
      %s19 = sphi 0, %s31
      %s20 = sphi 0, %s27
      %s21 = sphi 0, %s19
      %s22 = sphi 0, %s20
      %s23 = sphi 0, %s21
      %s24 = sphi 0, %s22
      %s32 = sphi 0, %s32
      %s34 = sphi 0, %s32
      %s35 = sphi 0, %s34
      %s49 = sphi 0, %s35
      %s55 = sphi 0, %s57
      %s58 = sphi 0, %s55
      %s59 = sphi 0, %s58
      %s75 = sphi 0, %s59
      %s83 = sphi 0, %s85
      %s86 = sphi 0, %s83
      %s87 = sphi 0, %s86
      %s103 = sphi 0, %s87
      %s107 = sphi 0, %s107
      %s109 = sphi 0, %s107
      %s110 = sphi 0, %s109
      %s124 = sphi 0, %s110
      %s128 = sphi 0, %s128
      %s130 = sphi 0, %s128
      %s131 = sphi 0, %s130
      %s145 = sphi 0, %s131
      %s153 = sphi 0, %s155
      %s156 = sphi 0, %s153
      %s157 = sphi 0, %s156
      %s173 = sphi 0, %s157
    $region4: #{self_attention_3d.1} parent=1 // loop_header_branch
      %15 = sbr.rel (%p13) target = $region8
    $region5: #{self_attention_3d.1} parent=1 // loop_body
      %s17 = ssub.s32 %s12, 1
      %s18 = ssub.s32 %s12, 2
      %s25 = sadd.s32 1, %s20
      %p26 = scmp.ge.s32.totalorder %s25, 2
      %s27 = scalar_select %p26, 0, %s25
      %s28 = sadd.s32 1, %s19
      %s29 = scalar_select %p26, %s28, %s19
      %p30 = scmp.ge.s32.totalorder %s29, 2
      %s31 = scalar_select %p30, 0, %s29
      %s33 = sadd.s32 %s32, 1
      %p36 = scmp.eq.s32.totalorder %s12, 3
      %p37 = scmp.ne.s32.totalorder %s32, %s34
      %p38 = scmp.eq.s32.totalorder %s12, 0
      %p39 = por %p37, %p38
      %p40 = scmp.ne.s32.totalorder %s32, %s34
      %p41 = scmp.eq.s32.totalorder %s17, 3
      %p42 = por %p40, %p41
      %p43 = scmp.ne.s32.totalorder %s34, %s35
      %p44 = scmp.eq.s32.totalorder %s17, 0
      %p45 = por %p43, %p44
      %p46 = scmp.ne.s32.totalorder %s34, %s35
      %p47 = scmp.eq.s32.totalorder %s18, 3
      %p48 = por %p46, %p47
      %p50 = scmp.ne.s32.totalorder %s35, %s49
      %p51 = scmp.eq.s32.totalorder %s18, 0
      %p52 = por %p50, %p51
      %s53 = ssub.s32 %s19, %s31
      %p54 = scmp.eq.s32.totalorder %s53, 0
      %s56 = sadd.s32 %s55, 1
      %s57 = scalar_select %p54, %s55, %s56
      %p60 = pneg %p54
      %p61 = scmp.eq.s32.totalorder %s12, 3
      %p62 = por %p60, %p61
      %p63 = scmp.ne.s32.totalorder %s55, %s58
      %p64 = scmp.eq.s32.totalorder %s12, 0
      %p65 = por %p63, %p64
      %p66 = scmp.ne.s32.totalorder %s55, %s58
      %p67 = scmp.eq.s32.totalorder %s17, 3
      %p68 = por %p66, %p67
      %p69 = scmp.ne.s32.totalorder %s58, %s59
      %p70 = scmp.eq.s32.totalorder %s17, 0
      %p71 = por %p69, %p70
      %p72 = scmp.ne.s32.totalorder %s58, %s59
      %p73 = scmp.eq.s32.totalorder %s18, 3
      %p74 = por %p72, %p73
      %p76 = scmp.ne.s32.totalorder %s59, %s75
      %p77 = scmp.eq.s32.totalorder %s18, 0
      %p78 = por %p76, %p77
      %s79 = ssub.s32 %s19, %s31
      %s80 = ssub.s32 %s20, %s27
      %s81 = sor.u32 %s79, %s80
      %p82 = scmp.eq.s32.totalorder %s81, 0
      %s84 = sadd.s32 %s83, 1
      %s85 = scalar_select %p82, %s83, %s84
      %p88 = pneg %p82
      %p89 = scmp.eq.s32.totalorder %s12, 3
      %p90 = por %p88, %p89
      %p91 = scmp.ne.s32.totalorder %s83, %s86
      %p92 = scmp.eq.s32.totalorder %s12, 0
      %p93 = por %p91, %p92
      %p94 = scmp.ne.s32.totalorder %s83, %s86
      %p95 = scmp.eq.s32.totalorder %s17, 3
      %p96 = por %p94, %p95
      %p97 = scmp.ne.s32.totalorder %s86, %s87
      %p98 = scmp.eq.s32.totalorder %s17, 0
      %p99 = por %p97, %p98
      %p100 = scmp.ne.s32.totalorder %s86, %s87
      %p101 = scmp.eq.s32.totalorder %s18, 3
      %p102 = por %p100, %p101
      %p104 = scmp.ne.s32.totalorder %s87, %s103
      %p105 = scmp.eq.s32.totalorder %s18, 0
      %p106 = por %p104, %p105
      %s108 = sadd.s32 %s107, 1
      %p111 = scmp.eq.s32.totalorder %s12, 3
      %p112 = scmp.ne.s32.totalorder %s107, %s109
      %p113 = scmp.eq.s32.totalorder %s12, 0
      %p114 = por %p112, %p113
      %p115 = scmp.ne.s32.totalorder %s107, %s109
      %p116 = scmp.eq.s32.totalorder %s17, 3
      %p117 = por %p115, %p116
      %p118 = scmp.ne.s32.totalorder %s109, %s110
      %p119 = scmp.eq.s32.totalorder %s17, 0
      %p120 = por %p118, %p119
      %p121 = scmp.ne.s32.totalorder %s109, %s110
      %p122 = scmp.eq.s32.totalorder %s18, 3
      %p123 = por %p121, %p122
      %p125 = scmp.ne.s32.totalorder %s110, %s124
      %p126 = scmp.eq.s32.totalorder %s18, 0
      %p127 = por %p125, %p126
      %s129 = sadd.s32 %s128, 1
      %p132 = scmp.eq.s32.totalorder %s12, 3
      %p133 = scmp.ne.s32.totalorder %s128, %s130
      %p134 = scmp.eq.s32.totalorder %s12, 0
      %p135 = por %p133, %p134
      %p136 = scmp.ne.s32.totalorder %s128, %s130
      %p137 = scmp.eq.s32.totalorder %s17, 3
      %p138 = por %p136, %p137
      %p139 = scmp.ne.s32.totalorder %s130, %s131
      %p140 = scmp.eq.s32.totalorder %s17, 0
      %p141 = por %p139, %p140
      %p142 = scmp.ne.s32.totalorder %s130, %s131
      %p143 = scmp.eq.s32.totalorder %s18, 3
      %p144 = por %p142, %p143
      %p146 = scmp.ne.s32.totalorder %s131, %s145
      %p147 = scmp.eq.s32.totalorder %s18, 0
      %p148 = por %p146, %p147
      %s149 = ssub.s32 %s19, %s31
      %s150 = ssub.s32 %s20, %s27
      %s151 = sor.u32 %s149, %s150
      %p152 = scmp.eq.s32.totalorder %s151, 0
      %s154 = sadd.s32 %s153, 1
      %s155 = scalar_select %p152, %s153, %s154
      %p158 = pneg %p152
      %p159 = scmp.eq.s32.totalorder %s12, 3
      %p160 = por %p158, %p159
      %p161 = scmp.ne.s32.totalorder %s153, %s156
      %p162 = scmp.eq.s32.totalorder %s12, 0
      %p163 = por %p161, %p162
      %p164 = scmp.ne.s32.totalorder %s153, %s156
      %p165 = scmp.eq.s32.totalorder %s17, 3
      %p166 = por %p164, %p165
      %p167 = scmp.ne.s32.totalorder %s156, %s157
      %p168 = scmp.eq.s32.totalorder %s17, 0
      %p169 = por %p167, %p168
      %p170 = scmp.ne.s32.totalorder %s156, %s157
      %p171 = scmp.eq.s32.totalorder %s18, 3
      %p172 = por %p170, %p171
      %p174 = scmp.ne.s32.totalorder %s157, %s173
      %p175 = scmp.eq.s32.totalorder %s18, 0
      %p176 = por %p174, %p175
      %p177 = scmp.le.s32.totalorder 1, %s12
      %p178 = scmp.lt.s32.totalorder %s12, 5
      %p179 = pnand %p177, %p178
      %p180 = pneg %p179
      // Predicated region
      $region9: #{self_attention_3d.1} parent=5 // pred_check
        _
      $region10: #{self_attention_3d.1} parent=5 // pred_check_branch
        %182 = sbr.rel (%p179) target = $region12
      $region11: #{self_attention_3d.1} parent=5 // pred_region
        %s183 = ssub.s32 %s12, 1
        // Predicated region
        $region13: #{self_attention_3d.1} parent=11 // pred_check
          %p184 = pneg %p45
        $region14: #{self_attention_3d.1} parent=11 // pred_check_branch
          %186 = sbr.rel (%p184) target = $region16
        $region15: #{self_attention_3d.1} parent=11 // pred_region
          _
        $region16: #{self_attention_3d.1} parent=11 // pred_fallthru
          _
        // Predicated region
        $region17: #{self_attention_3d.1} parent=11 // pred_check
          %p187 = pneg %p120
        $region18: #{self_attention_3d.1} parent=11 // pred_check_branch
          %189 = sbr.rel (%p187) target = $region20
        $region19: #{self_attention_3d.1} parent=11 // pred_region
          _
        $region20: #{self_attention_3d.1} parent=11 // pred_fallthru
          _
        // Predicated region
        $region21: #{self_attention_3d.1} parent=11 // pred_check
          %p190 = pneg %p141
        $region22: #{self_attention_3d.1} parent=11 // pred_check_branch
          %192 = sbr.rel (%p190) target = $region24
        $region23: #{self_attention_3d.1} parent=11 // pred_region
          _
        $region24: #{self_attention_3d.1} parent=11 // pred_fallthru
          _
      $region12: #{self_attention_3d.1} parent=5 // pred_fallthru
        _
      %p193 = scmp.lt.s32.totalorder %s12, 4
      // Predicated region
      $region25: #{self_attention_3d.1} parent=5 // pred_check
        %p194 = pneg %p193
      $region26: #{self_attention_3d.1} parent=5 // pred_check_branch
        %196 = sbr.rel (%p194) target = $region28
      $region27: #{self_attention_3d.1} parent=5 // pred_region
        // Predicated region
        $region29: #{self_attention_3d.1} parent=27 // pred_check
          %p197 = pneg %p65
        $region30: #{self_attention_3d.1} parent=27 // pred_check_branch
          %199 = sbr.rel (%p197) target = $region32
        $region31: #{self_attention_3d.1} parent=27 // pred_region
          %p200 = scmp.lt.s32.totalorder %s19, 1
          %s201 = scalar_select %p200, %s19, 1
          %s202 = smul.addr %s201, 64
          %s203 = smul.addr %s202, 8
          %s204 = scalar_lea.vmem %s1, %s203
        $region32: #{self_attention_3d.1} parent=27 // pred_fallthru
          _
        // Predicated region
        $region33: #{self_attention_3d.1} parent=27 // pred_check
          %p205 = pneg %p93
        $region34: #{self_attention_3d.1} parent=27 // pred_check_branch
          %207 = sbr.rel (%p205) target = $region36
        $region35: #{self_attention_3d.1} parent=27 // pred_region
          %s208 = smul.u32 32, %s20
          %p209 = scmp.lt.s32.totalorder %s19, 1
          %s210 = scalar_select %p209, %s19, 1
          %p211 = scmp.lt.s32.totalorder %s208, 63
          %s212 = scalar_select %p211, %s208, 63
          %s213 = smul.addr %s210, 64
          %s214 = sadd.s32 %s212, %s213
          %s215 = smul.addr %s214, 4
          %s216 = scalar_lea.vmem %s2, %s215
          %s217 = smul.u32 32, %s20
        $region36: #{self_attention_3d.1} parent=27 // pred_fallthru
          _
      $region28: #{self_attention_3d.1} parent=5 // pred_fallthru
        _
      %p218 = scmp.le.s32.totalorder 1, %s12
      %p219 = scmp.lt.s32.totalorder %s12, 5
      %p220 = pnand %p218, %p219
      %p221 = pneg %p220
      // Predicated region
      $region37: #{self_attention_3d.1} parent=5 // pred_check
        _
      $region38: #{self_attention_3d.1} parent=5 // pred_check_branch
        %223 = sbr.rel (%p220) target = $region40
      $region39: #{self_attention_3d.1} parent=5 // pred_region
        %s224 = ssub.s32 %s12, 1
        %p225 = pneg %p45
        %p226 = pneg %p42
        %p227 = scmp.lt.s32.totalorder %s21, 1
        %s228 = scalar_select %p227, %s21, 1
        %s229 = smul.addr %s228, 64
        %s230 = smul.addr %s229, 8
        %s231 = scalar_lea.vmem %s1, %s230
        %p232 = pneg %p71
        %p233 = pneg %p68
        %s234 = smul.u32 32, %s22
        %p235 = scmp.lt.s32.totalorder %s21, 1
        %s236 = scalar_select %p235, %s21, 1
        %p237 = scmp.lt.s32.totalorder %s234, 63
        %s238 = scalar_select %p237, %s234, 63
        %s239 = smul.addr %s236, 64
        %s240 = sadd.s32 %s238, %s239
        %s241 = smul.addr %s240, 4
        %s242 = scalar_lea.vmem %s2, %s241
        %p243 = pneg %p99
        %p244 = pneg %p96
        %p245 = pneg %p120
        %p246 = pneg %p117
        %p247 = pneg %p141
        %p248 = pneg %p138
        %p249 = pneg %p169
        %p250 = pneg %p166
        %s251 = sand.u32 %s156, 1
        %s252 = sand.u32 %s156, 1
        %s253 = smul.addr %s252, 256
        %s254 = scalar_lea.vmem [#allocation4], %s253
        %p255 = scmp.lt.s32.totalorder %s21, 1
        %s256 = scalar_select %p255, %s21, 1
        %s257 = smul.addr %s256, 64
        %s258 = smul.addr %s257, 8
        %s259 = scalar_lea.vmem %s1, %s258
        %s260 = smul.u32 32, %s22
        %p261 = scmp.lt.s32.totalorder %s21, 1
        %s262 = scalar_select %p261, %s21, 1
        %p263 = scmp.lt.s32.totalorder %s260, 63
        %s264 = scalar_select %p263, %s260, 63
        %s265 = smul.addr %s262, 64
        %s266 = sadd.s32 %s264, %s265
        %s267 = smul.addr %s266, 4
        %s268 = scalar_lea.vmem %s2, %s267
        %s269 = smul.u32 32, %s22
        %s270 = smul.u32 2, %s22
        %p273 = scmp.eq.s32.totalorder %s22, 0
        // Predicated region
        $region41: #{self_attention_3d.1} parent=39 // pred_check
          %p274 = pneg %p273
        $region42: #{self_attention_3d.1} parent=39 // pred_check_branch
          %276 = sbr.rel (%p274) target = $region44
        $region43: #{self_attention_3d.1} parent=39 // pred_region
          %v277 = vld [vmem:[%s259] sm:$0xff]
          %v278 = vld [vmem:[%s259 + $0x8] sm:$0xff]
          %v279 = vld [vmem:[%s259 + $0x10] sm:$0xff]
          %v280 = vld [vmem:[%s259 + $0x18] sm:$0xff]
          %v281 = vld [vmem:[%s259 + $0x20] sm:$0xff]
          %v282 = vld [vmem:[%s259 + $0x28] sm:$0xff]
          %v283 = vld [vmem:[%s259 + $0x30] sm:$0xff]
          %v284 = vld [vmem:[%s259 + $0x38] sm:$0xff]
          %v285 = vld [vmem:[%s259 + $0x40] sm:$0xff]
          %v286 = vld [vmem:[%s259 + $0x48] sm:$0xff]
          %v287 = vld [vmem:[%s259 + $0x50] sm:$0xff]
          %v288 = vld [vmem:[%s259 + $0x58] sm:$0xff]
          %v289 = vld [vmem:[%s259 + $0x60] sm:$0xff]
          %v290 = vld [vmem:[%s259 + $0x68] sm:$0xff]
          %v291 = vld [vmem:[%s259 + $0x70] sm:$0xff]
          %v292 = vld [vmem:[%s259 + $0x78] sm:$0xff]
          %v293 = vld [vmem:[%s259 + $0x80] sm:$0xff]
          %v294 = vld [vmem:[%s259 + $0x88] sm:$0xff]
          %v295 = vld [vmem:[%s259 + $0x90] sm:$0xff]
          %v296 = vld [vmem:[%s259 + $0x98] sm:$0xff]
          %v297 = vld [vmem:[%s259 + $0xa0] sm:$0xff]
          %v298 = vld [vmem:[%s259 + $0xa8] sm:$0xff]
          %v299 = vld [vmem:[%s259 + $0xb0] sm:$0xff]
          %v300 = vld [vmem:[%s259 + $0xb8] sm:$0xff]
          %v301 = vld [vmem:[%s259 + $0xc0] sm:$0xff]
          %v302 = vld [vmem:[%s259 + $0xc8] sm:$0xff]
          %v303 = vld [vmem:[%s259 + $0xd0] sm:$0xff]
          %v304 = vld [vmem:[%s259 + $0xd8] sm:$0xff]
          %v305 = vld [vmem:[%s259 + $0xe0] sm:$0xff]
          %v306 = vld [vmem:[%s259 + $0xe8] sm:$0xff]
          %v307 = vld [vmem:[%s259 + $0xf0] sm:$0xff]
          %v308 = vld [vmem:[%s259 + $0xf8] sm:$0xff]
          %v309 = vld [vmem:[%s259 + $0x100] sm:$0xff]
          %v310 = vld [vmem:[%s259 + $0x108] sm:$0xff]
          %v311 = vld [vmem:[%s259 + $0x110] sm:$0xff]
          %v312 = vld [vmem:[%s259 + $0x118] sm:$0xff]
          %v313 = vld [vmem:[%s259 + $0x120] sm:$0xff]
          %v314 = vld [vmem:[%s259 + $0x128] sm:$0xff]
          %v315 = vld [vmem:[%s259 + $0x130] sm:$0xff]
          %v316 = vld [vmem:[%s259 + $0x138] sm:$0xff]
          %v317 = vld [vmem:[%s259 + $0x140] sm:$0xff]
          %v318 = vld [vmem:[%s259 + $0x148] sm:$0xff]
          %v319 = vld [vmem:[%s259 + $0x150] sm:$0xff]
          %v320 = vld [vmem:[%s259 + $0x158] sm:$0xff]
          %v321 = vld [vmem:[%s259 + $0x160] sm:$0xff]
          %v322 = vld [vmem:[%s259 + $0x168] sm:$0xff]
          %v323 = vld [vmem:[%s259 + $0x170] sm:$0xff]
          %v324 = vld [vmem:[%s259 + $0x178] sm:$0xff]
          %v325 = vld [vmem:[%s259 + $0x180] sm:$0xff]
          %v326 = vld [vmem:[%s259 + $0x188] sm:$0xff]
          %v327 = vld [vmem:[%s259 + $0x190] sm:$0xff]
          %v328 = vld [vmem:[%s259 + $0x198] sm:$0xff]
          %v329 = vld [vmem:[%s259 + $0x1a0] sm:$0xff]
          %v330 = vld [vmem:[%s259 + $0x1a8] sm:$0xff]
          %v331 = vld [vmem:[%s259 + $0x1b0] sm:$0xff]
          %v332 = vld [vmem:[%s259 + $0x1b8] sm:$0xff]
          %v333 = vld [vmem:[%s259 + $0x1c0] sm:$0xff]
          %v334 = vld [vmem:[%s259 + $0x1c8] sm:$0xff]
          %v335 = vld [vmem:[%s259 + $0x1d0] sm:$0xff]
          %v336 = vld [vmem:[%s259 + $0x1d8] sm:$0xff]
          %v337 = vld [vmem:[%s259 + $0x1e0] sm:$0xff]
          %v338 = vld [vmem:[%s259 + $0x1e8] sm:$0xff]
          %v339 = vld [vmem:[%s259 + $0x1f0] sm:$0xff]
          %v340 = vld [vmem:[%s259 + $0x1f8] sm:$0xff]
          %v341 = vpack.c.bf16 %v281, %v277
          %v342 = vpack.c.bf16 %v282, %v278
          %v343 = vpack.c.bf16 %v283, %v279
          %v344 = vpack.c.bf16 %v284, %v280
          %v345 = vpack.c.bf16 %v289, %v285
          %v346 = vpack.c.bf16 %v290, %v286
          %v347 = vpack.c.bf16 %v291, %v287
          %v348 = vpack.c.bf16 %v292, %v288
          %v349 = vpack.c.bf16 %v297, %v293
          %v350 = vpack.c.bf16 %v298, %v294
          %v351 = vpack.c.bf16 %v299, %v295
          %v352 = vpack.c.bf16 %v300, %v296
          %v353 = vpack.c.bf16 %v305, %v301
          %v354 = vpack.c.bf16 %v306, %v302
          %v355 = vpack.c.bf16 %v307, %v303
          %v356 = vpack.c.bf16 %v308, %v304
          %v357 = vpack.c.bf16 %v313, %v309
          %v358 = vpack.c.bf16 %v314, %v310
          %v359 = vpack.c.bf16 %v315, %v311
          %v360 = vpack.c.bf16 %v316, %v312
          %v361 = vpack.c.bf16 %v321, %v317
          %v362 = vpack.c.bf16 %v322, %v318
          %v363 = vpack.c.bf16 %v323, %v319
          %v364 = vpack.c.bf16 %v324, %v320
          %v365 = vpack.c.bf16 %v329, %v325
          %v366 = vpack.c.bf16 %v330, %v326
          %v367 = vpack.c.bf16 %v331, %v327
          %v368 = vpack.c.bf16 %v332, %v328
          %v369 = vpack.c.bf16 %v337, %v333
          %v370 = vpack.c.bf16 %v338, %v334
          %v371 = vpack.c.bf16 %v339, %v335
          %v372 = vpack.c.bf16 %v340, %v336
          %v373 = vld [vmem:[%s3] sm:$0xf]
          %v374 = vld [vmem:[%s3 + $0x4] sm:$0xf]
          %v375 = vld [vmem:[%s3 + $0x8] sm:$0xf]
          %v376 = vld [vmem:[%s3 + $0xc] sm:$0xf]
          %v377 = vld [vmem:[%s3 + $0x10] sm:$0xf]
          %v378 = vld [vmem:[%s3 + $0x14] sm:$0xf]
          %v379 = vld [vmem:[%s3 + $0x18] sm:$0xf]
          %v380 = vld [vmem:[%s3 + $0x1c] sm:$0xf]
          %v381 = vld [vmem:[%s3 + $0x20] sm:$0xf]
          %v382 = vld [vmem:[%s3 + $0x24] sm:$0xf]
          %v383 = vld [vmem:[%s3 + $0x28] sm:$0xf]
          %v384 = vld [vmem:[%s3 + $0x2c] sm:$0xf]
          %v385 = vld [vmem:[%s3 + $0x30] sm:$0xf]
          %v386 = vld [vmem:[%s3 + $0x34] sm:$0xf]
          %v387 = vld [vmem:[%s3 + $0x38] sm:$0xf]
          %v388 = vld [vmem:[%s3 + $0x3c] sm:$0xf]
          %v389 = vld [vmem:[%s3 + $0x40] sm:$0xf]
          %v390 = vld [vmem:[%s3 + $0x44] sm:$0xf]
          %v391 = vld [vmem:[%s4] sm:$0xff]
          %v392 = vld [vmem:[%s4 + $0x8] sm:$0xff]
          %v393 = vld [vmem:[%s4 + $0x10] sm:$0xff]
          %v394 = vld [vmem:[%s4 + $0x18] sm:$0xff]
          %v395 = vld [vmem:[%s4 + $0x20] sm:$0xff]
          %v396 = vld [vmem:[%s4 + $0x28] sm:$0xff]
          %v397 = vld [vmem:[%s4 + $0x30] sm:$0xff]
          %v398 = vld [vmem:[%s4 + $0x38] sm:$0xff]
          %v399 = vld [vmem:[%s4 + $0x40] sm:$0xff]
          %v400 = vld [vmem:[%s4 + $0x48] sm:$0xff]
          %v401 = vld [vmem:[%s4 + $0x50] sm:$0xff]
          %v402 = vld [vmem:[%s4 + $0x58] sm:$0xff]
          %v403 = vld [vmem:[%s4 + $0x60] sm:$0xff]
          %v404 = vld [vmem:[%s4 + $0x68] sm:$0xff]
          %v405 = vld [vmem:[%s4 + $0x70] sm:$0xff]
          %v406 = vld [vmem:[%s4 + $0x78] sm:$0xff]
          %v407 = vld [vmem:[%s4 + $0x80] sm:$0xff]
          %v408 = vld [vmem:[%s4 + $0x88] sm:$0xff]
          %410 = vset.pattern.permute.xlu0 0
          %411 = vperm.xlu0 %410, %v391
          %v412 = vpop.permute.xlu0 %411
          %415 = vset.pattern.permute.xlu0 0
          %416 = vperm.xlu0 %415, %v392
          %v417 = vpop.permute.xlu0 %416
          %420 = vset.pattern.permute.xlu0 0
          %421 = vperm.xlu0 %420, %v393
          %v422 = vpop.permute.xlu0 %421
          %425 = vset.pattern.permute.xlu0 0
          %426 = vperm.xlu0 %425, %v394
          %v427 = vpop.permute.xlu0 %426
          %430 = vset.pattern.permute.xlu0 0
          %431 = vperm.xlu0 %430, %v395
          %v432 = vpop.permute.xlu0 %431
          %435 = vset.pattern.permute.xlu0 0
          %436 = vperm.xlu0 %435, %v396
          %v437 = vpop.permute.xlu0 %436
          %440 = vset.pattern.permute.xlu0 0
          %441 = vperm.xlu0 %440, %v397
          %v442 = vpop.permute.xlu0 %441
          %445 = vset.pattern.permute.xlu0 0
          %446 = vperm.xlu0 %445, %v398
          %v447 = vpop.permute.xlu0 %446
          %450 = vset.pattern.permute.xlu0 0
          %451 = vperm.xlu0 %450, %v399
          %v452 = vpop.permute.xlu0 %451
          %455 = vset.pattern.permute.xlu0 0
          %456 = vperm.xlu0 %455, %v400
          %v457 = vpop.permute.xlu0 %456
          %460 = vset.pattern.permute.xlu0 0
          %461 = vperm.xlu0 %460, %v401
          %v462 = vpop.permute.xlu0 %461
          %465 = vset.pattern.permute.xlu0 0
          %466 = vperm.xlu0 %465, %v402
          %v467 = vpop.permute.xlu0 %466
          %470 = vset.pattern.permute.xlu0 0
          %471 = vperm.xlu0 %470, %v403
          %v472 = vpop.permute.xlu0 %471
          %475 = vset.pattern.permute.xlu0 0
          %476 = vperm.xlu0 %475, %v404
          %v477 = vpop.permute.xlu0 %476
          %480 = vset.pattern.permute.xlu0 0
          %481 = vperm.xlu0 %480, %v405
          %v482 = vpop.permute.xlu0 %481
          %485 = vset.pattern.permute.xlu0 0
          %486 = vperm.xlu0 %485, %v406
          %v487 = vpop.permute.xlu0 %486
          %490 = vset.pattern.permute.xlu0 0
          %491 = vperm.xlu0 %490, %v407
          %v492 = vpop.permute.xlu0 %491
          %495 = vset.pattern.permute.xlu0 0
          %496 = vperm.xlu0 %495, %v408
          %v497 = vpop.permute.xlu0 %496
          %v517 = vunpack.c.l.b16 %v373
          %v518 = vunpack.c.l.b16 %v374
          %v519 = vunpack.c.l.b16 %v375
          %v520 = vunpack.c.l.b16 %v376
          %v521 = vunpack.c.l.b16 %v377
          %v522 = vunpack.c.l.b16 %v378
          %v523 = vunpack.c.l.b16 %v379
          %v524 = vunpack.c.l.b16 %v380
          %v525 = vunpack.c.l.b16 %v381
          %v526 = vunpack.c.l.b16 %v382
          %v527 = vunpack.c.l.b16 %v383
          %v528 = vunpack.c.l.b16 %v384
          %v529 = vunpack.c.l.b16 %v385
          %v530 = vunpack.c.l.b16 %v386
          %v531 = vunpack.c.l.b16 %v387
          %v532 = vunpack.c.l.b16 %v388
          %v533 = vunpack.c.l.b16 %v389
          %v534 = vunpack.c.l.b16 %v390
          %v535 = vpack.c.b16 %v518, %v517
          %v536 = vpack.c.b16 %v520, %v519
          %v537 = vpack.c.b16 %v522, %v521
          %v538 = vpack.c.b16 %v524, %v523
          %v539 = vpack.c.b16 %v526, %v525
          %v540 = vpack.c.b16 %v528, %v527
          %v541 = vpack.c.b16 %v530, %v529
          %v542 = vpack.c.b16 %v532, %v531
          %v543 = vpack.c.b16 %v534, %v533
          %553 = vmatprep.subr.bf16.mxu0 %v342
          %554 = vmatpush1.bf16.msra.mxu0 %v341
          %555 = vmatprep.subr.bf16.mxu0 %v346
          %556 = vmatpush1.bf16.msra.mxu0 %v345
          %557 = vmatprep.subr.bf16.mxu0 %v350
          %558 = vmatpush1.bf16.msra.mxu0 %v349
          %559 = vmatprep.subr.bf16.mxu0 %v354
          %560 = vmatpush1.bf16.msra.mxu0 %v353
          %561 = vmatprep.subr.bf16.mxu0 %v358
          %562 = vmatpush1.bf16.msra.mxu0 %v357
          %563 = vmatprep.subr.bf16.mxu0 %v362
          %564 = vmatpush1.bf16.msra.mxu0 %v361
          %565 = vmatprep.subr.bf16.mxu0 %v366
          %566 = vmatpush1.bf16.msra.mxu0 %v365
          %567 = vmatprep.subr.bf16.mxu0 %v370
          %568 = vmatpush1.bf16.msra.mxu0 %v369
          %569 = vmatprep.subr.bf16.mxu0 0
          %570 = vmatpush1.bf16.msra.mxu0 0
          %571 = vmatprep.subr.bf16.mxu0 0
          %572 = vmatpush1.bf16.msra.mxu0 0
          %573 = vmatprep.subr.bf16.mxu0 0
          %574 = vmatpush1.bf16.msra.mxu0 0
          %575 = vmatprep.subr.bf16.mxu0 0
          %576 = vmatpush1.bf16.msra.mxu0 0
          %577 = vmatprep.subr.bf16.mxu0 0
          %578 = vmatpush1.bf16.msra.mxu0 0
          %579 = vmatprep.subr.bf16.mxu0 0
          %580 = vmatpush1.bf16.msra.mxu0 0
          %581 = vmatprep.subr.bf16.mxu0 0
          %582 = vmatpush1.bf16.msra.mxu0 0
          %583 = vmatprep.subr.bf16.mxu0 0
          %584 = vmatpush1.bf16.msra.mxu0 0
          %585 = vmatprep.mubr.bf16.mxu0 0
          %586 = vmatmul.mubr.bf16.gmra.mrb[0].mxu0 %v535
          %v587 = vpop.f32.mrb[0].mxu0
          %v588 = vadd.f32 %v412, %v587
          %v589 = vpop.f32.mrb[0].mxu0
          %v590 = vadd.f32 %v412, %v589
          %v591 = vpop.f32.mrb[0].mxu0
          %v592 = vadd.f32 %v417, %v591
          %v593 = vpop.f32.mrb[0].mxu0
          %v594 = vadd.f32 %v417, %v593
          %595 = vmatprep.mubr.bf16.mxu0 0
          %596 = vmatmul.mubr.bf16.gmra.mrb[0].mxu0 %v536
          %v597 = vpop.f32.mrb[0].mxu0
          %v598 = vadd.f32 %v422, %v597
          %v599 = vpop.f32.mrb[0].mxu0
          %v600 = vadd.f32 %v422, %v599
          %v601 = vpop.f32.mrb[0].mxu0
          %v602 = vadd.f32 %v427, %v601
          %v603 = vpop.f32.mrb[0].mxu0
          %v604 = vadd.f32 %v427, %v603
          %605 = vmatprep.mubr.bf16.mxu0 0
          %606 = vmatmul.mubr.bf16.gmra.mrb[0].mxu0 %v537
          %v607 = vpop.f32.mrb[0].mxu0
          %v608 = vadd.f32 %v432, %v607
          %v609 = vpop.f32.mrb[0].mxu0
          %v610 = vadd.f32 %v432, %v609
          %v611 = vpop.f32.mrb[0].mxu0
          %v612 = vadd.f32 %v437, %v611
          %v613 = vpop.f32.mrb[0].mxu0
          %v614 = vadd.f32 %v437, %v613
          %615 = vmatprep.mubr.bf16.mxu0 0
          %616 = vmatmul.mubr.bf16.gmra.mrb[0].mxu0 %v538
          %v617 = vpop.f32.mrb[0].mxu0
          %v618 = vadd.f32 %v442, %v617
          %v619 = vpop.f32.mrb[0].mxu0
          %v620 = vadd.f32 %v442, %v619
          %v621 = vpop.f32.mrb[0].mxu0
          %v622 = vadd.f32 %v447, %v621
          %v623 = vpop.f32.mrb[0].mxu0
          %v624 = vadd.f32 %v447, %v623
          %625 = vmatprep.mubr.bf16.mxu0 0
          %626 = vmatmul.mubr.bf16.gmra.mrb[0].mxu0 %v539
          %v627 = vpop.f32.mrb[0].mxu0
          %v628 = vadd.f32 %v452, %v627
          %v629 = vpop.f32.mrb[0].mxu0
          %v630 = vadd.f32 %v452, %v629
          %v631 = vpop.f32.mrb[0].mxu0
          %v632 = vadd.f32 %v457, %v631
          %v633 = vpop.f32.mrb[0].mxu0
          %v634 = vadd.f32 %v457, %v633
          %635 = vmatprep.mubr.bf16.mxu0 0
          %636 = vmatmul.mubr.bf16.gmra.mrb[0].mxu0 %v540
          %v637 = vpop.f32.mrb[0].mxu0
          %v638 = vadd.f32 %v462, %v637
          %v639 = vpop.f32.mrb[0].mxu0
          %v640 = vadd.f32 %v462, %v639
          %v641 = vpop.f32.mrb[0].mxu0
          %v642 = vadd.f32 %v467, %v641
          %v643 = vpop.f32.mrb[0].mxu0
          %v644 = vadd.f32 %v467, %v643
          %645 = vmatprep.mubr.bf16.mxu0 0
          %646 = vmatmul.mubr.bf16.gmra.mrb[0].mxu0 %v541
          %v647 = vpop.f32.mrb[0].mxu0
          %v648 = vadd.f32 %v472, %v647
          %v649 = vpop.f32.mrb[0].mxu0
          %v650 = vadd.f32 %v472, %v649
          %v651 = vpop.f32.mrb[0].mxu0
          %v652 = vadd.f32 %v477, %v651
          %v653 = vpop.f32.mrb[0].mxu0
          %v654 = vadd.f32 %v477, %v653
          %655 = vmatprep.mubr.bf16.mxu0 0
          %656 = vmatmul.mubr.bf16.gmra.mrb[0].mxu0 %v542
          %v657 = vpop.f32.mrb[0].mxu0
          %v658 = vadd.f32 %v482, %v657
          %v659 = vpop.f32.mrb[0].mxu0
          %v660 = vadd.f32 %v482, %v659
          %v661 = vpop.f32.mrb[0].mxu0
          %v662 = vadd.f32 %v487, %v661
          %v663 = vpop.f32.mrb[0].mxu0
          %v664 = vadd.f32 %v487, %v663
          %665 = vmatprep.mubr.bf16.mxu0 0
          %666 = vmatmul.mubr.bf16.gmra.mrb[0].mxu0 %v543
          %v667 = vpop.f32.mrb[0].mxu0
          %v668 = vadd.f32 %v492, %v667
          %v669 = vpop.f32.mrb[0].mxu0
          %v670 = vadd.f32 %v492, %v669
          %v671 = vpop.f32.mrb[0].mxu0
          %v672 = vadd.f32 %v497, %v671
          %v673 = vpop.f32.mrb[0].mxu0
          %v674 = vadd.f32 %v497, %v673
          %675 = vdwg.mxu0
          %676 = vmatprep.subr.bf16.mxu0 %v344
          %677 = vmatpush1.bf16.msra.mxu0 %v343
          %678 = vmatprep.subr.bf16.mxu0 %v348
          %679 = vmatpush1.bf16.msra.mxu0 %v347
          %680 = vmatprep.subr.bf16.mxu0 %v352
          %681 = vmatpush1.bf16.msra.mxu0 %v351
          %682 = vmatprep.subr.bf16.mxu0 %v356
          %683 = vmatpush1.bf16.msra.mxu0 %v355
          %684 = vmatprep.subr.bf16.mxu0 %v360
          %685 = vmatpush1.bf16.msra.mxu0 %v359
          %686 = vmatprep.subr.bf16.mxu0 %v364
          %687 = vmatpush1.bf16.msra.mxu0 %v363
          %688 = vmatprep.subr.bf16.mxu0 %v368
          %689 = vmatpush1.bf16.msra.mxu0 %v367
          %690 = vmatprep.subr.bf16.mxu0 %v372
          %691 = vmatpush1.bf16.msra.mxu0 %v371
          %692 = vmatprep.subr.bf16.mxu0 0
          %693 = vmatpush1.bf16.msra.mxu0 0
          %694 = vmatprep.subr.bf16.mxu0 0
          %695 = vmatpush1.bf16.msra.mxu0 0
          %696 = vmatprep.subr.bf16.mxu0 0
          %697 = vmatpush1.bf16.msra.mxu0 0
          %698 = vmatprep.subr.bf16.mxu0 0
          %699 = vmatpush1.bf16.msra.mxu0 0
          %700 = vmatprep.subr.bf16.mxu0 0
          %701 = vmatpush1.bf16.msra.mxu0 0
          %702 = vmatprep.subr.bf16.mxu0 0
          %703 = vmatpush1.bf16.msra.mxu0 0
          %704 = vmatprep.subr.bf16.mxu0 0
          %705 = vmatpush1.bf16.msra.mxu0 0
          %706 = vmatprep.subr.bf16.mxu0 0
          %707 = vmatpush1.bf16.msra.mxu0 0
          %708 = vmatprep.mubr.bf16.mxu0 0
          %709 = vmatmul.mubr.bf16.gmra.mrb[0].mxu0 %v535
          %v710 = vpop.f32.mrb[0].mxu0
          %v711 = vadd.f32 %v412, %v710
          %v712 = vpop.f32.mrb[0].mxu0
          %v713 = vadd.f32 %v412, %v712
          %v714 = vpop.f32.mrb[0].mxu0
          %v715 = vadd.f32 %v417, %v714
          %v716 = vpop.f32.mrb[0].mxu0
          %v717 = vadd.f32 %v417, %v716
          %718 = vmatprep.mubr.bf16.mxu0 0
          %719 = vmatmul.mubr.bf16.gmra.mrb[0].mxu0 %v536
          %v720 = vpop.f32.mrb[0].mxu0
          %v721 = vadd.f32 %v422, %v720
          %v722 = vpop.f32.mrb[0].mxu0
          %v723 = vadd.f32 %v422, %v722
          %v724 = vpop.f32.mrb[0].mxu0
          %v725 = vadd.f32 %v427, %v724
          %v726 = vpop.f32.mrb[0].mxu0
          %v727 = vadd.f32 %v427, %v726
          %728 = vmatprep.mubr.bf16.mxu0 0
          %729 = vmatmul.mubr.bf16.gmra.mrb[0].mxu0 %v537
          %v730 = vpop.f32.mrb[0].mxu0
          %v731 = vadd.f32 %v432, %v730
          %v732 = vpop.f32.mrb[0].mxu0
          %v733 = vadd.f32 %v432, %v732
          %v734 = vpop.f32.mrb[0].mxu0
          %v735 = vadd.f32 %v437, %v734
          %v736 = vpop.f32.mrb[0].mxu0
          %v737 = vadd.f32 %v437, %v736
          %738 = vmatprep.mubr.bf16.mxu0 0
          %739 = vmatmul.mubr.bf16.gmra.mrb[0].mxu0 %v538
          %v740 = vpop.f32.mrb[0].mxu0
          %v741 = vadd.f32 %v442, %v740
          %v742 = vpop.f32.mrb[0].mxu0
          %v743 = vadd.f32 %v442, %v742
          %v744 = vpop.f32.mrb[0].mxu0
          %v745 = vadd.f32 %v447, %v744
          %v746 = vpop.f32.mrb[0].mxu0
          %v747 = vadd.f32 %v447, %v746
          %748 = vmatprep.mubr.bf16.mxu0 0
          %749 = vmatmul.mubr.bf16.gmra.mrb[0].mxu0 %v539
          %v750 = vpop.f32.mrb[0].mxu0
          %v751 = vadd.f32 %v452, %v750
          %v752 = vpop.f32.mrb[0].mxu0
          %v753 = vadd.f32 %v452, %v752
          %v754 = vpop.f32.mrb[0].mxu0
          %v755 = vadd.f32 %v457, %v754
          %v756 = vpop.f32.mrb[0].mxu0
          %v757 = vadd.f32 %v457, %v756
          %758 = vmatprep.mubr.bf16.mxu0 0
          %759 = vmatmul.mubr.bf16.gmra.mrb[0].mxu0 %v540
          %v760 = vpop.f32.mrb[0].mxu0
          %v761 = vadd.f32 %v462, %v760
          %v762 = vpop.f32.mrb[0].mxu0
          %v763 = vadd.f32 %v462, %v762
          %v764 = vpop.f32.mrb[0].mxu0
          %v765 = vadd.f32 %v467, %v764
          %v766 = vpop.f32.mrb[0].mxu0
          %v767 = vadd.f32 %v467, %v766
          %768 = vmatprep.mubr.bf16.mxu0 0
          %769 = vmatmul.mubr.bf16.gmra.mrb[0].mxu0 %v541
          %v770 = vpop.f32.mrb[0].mxu0
          %v771 = vadd.f32 %v472, %v770
          %v772 = vpop.f32.mrb[0].mxu0
          %v773 = vadd.f32 %v472, %v772
          %v774 = vpop.f32.mrb[0].mxu0
          %v775 = vadd.f32 %v477, %v774
          %v776 = vpop.f32.mrb[0].mxu0
          %v777 = vadd.f32 %v477, %v776
          %778 = vmatprep.mubr.bf16.mxu0 0
          %779 = vmatmul.mubr.bf16.gmra.mrb[0].mxu0 %v542
          %v780 = vpop.f32.mrb[0].mxu0
          %v781 = vadd.f32 %v482, %v780
          %v782 = vpop.f32.mrb[0].mxu0
          %v783 = vadd.f32 %v482, %v782
          %v784 = vpop.f32.mrb[0].mxu0
          %v785 = vadd.f32 %v487, %v784
          %v786 = vpop.f32.mrb[0].mxu0
          %v787 = vadd.f32 %v487, %v786
          %788 = vmatprep.mubr.bf16.mxu0 0
          %789 = vmatmul.mubr.bf16.gmra.mrb[0].mxu0 %v543
          %v790 = vpop.f32.mrb[0].mxu0
          %v791 = vadd.f32 %v492, %v790
          %v792 = vpop.f32.mrb[0].mxu0
          %v793 = vadd.f32 %v492, %v792
          %v794 = vpop.f32.mrb[0].mxu0
          %v795 = vadd.f32 %v497, %v794
          %v796 = vpop.f32.mrb[0].mxu0
          %v797 = vadd.f32 %v497, %v796
          %798 = vdwg.mxu0
          %v799 = vpack.c.bf16 %v592, %v588
          %v800 = vpack.c.bf16 %v594, %v590
          %v801 = vpack.c.bf16 %v715, %v711
          %v802 = vpack.c.bf16 %v717, %v713
          %v803 = vpack.c.bf16 %v602, %v598
          %v804 = vpack.c.bf16 %v604, %v600
          %v805 = vpack.c.bf16 %v725, %v721
          %v806 = vpack.c.bf16 %v727, %v723
          %v807 = vpack.c.bf16 %v612, %v608
          %v808 = vpack.c.bf16 %v614, %v610
          %v809 = vpack.c.bf16 %v735, %v731
          %v810 = vpack.c.bf16 %v737, %v733
          %v811 = vpack.c.bf16 %v622, %v618
          %v812 = vpack.c.bf16 %v624, %v620
          %v813 = vpack.c.bf16 %v745, %v741
          %v814 = vpack.c.bf16 %v747, %v743
          %v815 = vpack.c.bf16 %v632, %v628
          %v816 = vpack.c.bf16 %v634, %v630
          %v817 = vpack.c.bf16 %v755, %v751
          %v818 = vpack.c.bf16 %v757, %v753
          %v819 = vpack.c.bf16 %v642, %v638
          %v820 = vpack.c.bf16 %v644, %v640
          %v821 = vpack.c.bf16 %v765, %v761
          %v822 = vpack.c.bf16 %v767, %v763
          %v823 = vpack.c.bf16 %v652, %v648
          %v824 = vpack.c.bf16 %v654, %v650
          %v825 = vpack.c.bf16 %v775, %v771
          %v826 = vpack.c.bf16 %v777, %v773
          %v827 = vpack.c.bf16 %v662, %v658
          %v828 = vpack.c.bf16 %v664, %v660
          %v829 = vpack.c.bf16 %v785, %v781
          %v830 = vpack.c.bf16 %v787, %v783
          %v831 = vpack.c.bf16 %v672, %v668
          %v832 = vpack.c.bf16 %v674, %v670
          %v833 = vpack.c.bf16 %v795, %v791
          %v834 = vpack.c.bf16 %v797, %v793
          %835 = vst [vmem:[#allocation2] sm:$0xff] %v799
          %836 = vst [vmem:[#allocation2 + $0x8] sm:$0xff] %v800
          %837 = vst [vmem:[#allocation2 + $0x10] sm:$0xff] %v801
          %838 = vst [vmem:[#allocation2 + $0x18] sm:$0xff] %v802
          %839 = vst [vmem:[#allocation2 + $0x20] sm:$0xff] %v803
          %840 = vst [vmem:[#allocation2 + $0x28] sm:$0xff] %v804
          %841 = vst [vmem:[#allocation2 + $0x30] sm:$0xff] %v805
          %842 = vst [vmem:[#allocation2 + $0x38] sm:$0xff] %v806
          %843 = vst [vmem:[#allocation2 + $0x40] sm:$0xff] %v807
          %844 = vst [vmem:[#allocation2 + $0x48] sm:$0xff] %v808
          %845 = vst [vmem:[#allocation2 + $0x50] sm:$0xff] %v809
          %846 = vst [vmem:[#allocation2 + $0x58] sm:$0xff] %v810
          %847 = vst [vmem:[#allocation2 + $0x60] sm:$0xff] %v811
          %848 = vst [vmem:[#allocation2 + $0x68] sm:$0xff] %v812
          %849 = vst [vmem:[#allocation2 + $0x70] sm:$0xff] %v813
          %850 = vst [vmem:[#allocation2 + $0x78] sm:$0xff] %v814
          %851 = vst [vmem:[#allocation2 + $0x80] sm:$0xff] %v815
          %852 = vst [vmem:[#allocation2 + $0x88] sm:$0xff] %v816
          %853 = vst [vmem:[#allocation2 + $0x90] sm:$0xff] %v817
          %854 = vst [vmem:[#allocation2 + $0x98] sm:$0xff] %v818
          %855 = vst [vmem:[#allocation2 + $0xa0] sm:$0xff] %v819
          %856 = vst [vmem:[#allocation2 + $0xa8] sm:$0xff] %v820
          %857 = vst [vmem:[#allocation2 + $0xb0] sm:$0xff] %v821
          %858 = vst [vmem:[#allocation2 + $0xb8] sm:$0xff] %v822
          %859 = vst [vmem:[#allocation2 + $0xc0] sm:$0xff] %v823
          %860 = vst [vmem:[#allocation2 + $0xc8] sm:$0xff] %v824
          %861 = vst [vmem:[#allocation2 + $0xd0] sm:$0xff] %v825
          %862 = vst [vmem:[#allocation2 + $0xd8] sm:$0xff] %v826
          %863 = vst [vmem:[#allocation2 + $0xe0] sm:$0xff] %v827
          %864 = vst [vmem:[#allocation2 + $0xe8] sm:$0xff] %v828
          %865 = vst [vmem:[#allocation2 + $0xf0] sm:$0xff] %v829
          %866 = vst [vmem:[#allocation2 + $0xf8] sm:$0xff] %v830
          %867 = vst [vmem:[#allocation2 + $0x100] sm:$0xff] %v831
          %868 = vst [vmem:[#allocation2 + $0x108] sm:$0xff] %v832
          %869 = vst [vmem:[#allocation2 + $0x110] sm:$0xff] %v833
          %870 = vst [vmem:[#allocation2 + $0x118] sm:$0xff] %v834
        $region44: #{self_attention_3d.1} parent=39 // pred_fallthru
          _
        %v871 = vld [vmem:[%s268] sm:$0xf]
        %v872 = vld [vmem:[%s268 + $0x4] sm:$0xf]
        %v873 = vld [vmem:[%s268 + $0x8] sm:$0xf]
        %v874 = vld [vmem:[%s268 + $0xc] sm:$0xf]
        %v875 = vld [vmem:[%s268 + $0x10] sm:$0xf]
        %v876 = vld [vmem:[%s268 + $0x14] sm:$0xf]
        %v877 = vld [vmem:[%s268 + $0x18] sm:$0xf]
        %v878 = vld [vmem:[%s268 + $0x1c] sm:$0xf]
        %v879 = vld [vmem:[%s268 + $0x20] sm:$0xf]
        %v880 = vld [vmem:[%s268 + $0x24] sm:$0xf]
        %v881 = vld [vmem:[%s268 + $0x28] sm:$0xf]
        %v882 = vld [vmem:[%s268 + $0x2c] sm:$0xf]
        %v883 = vld [vmem:[%s268 + $0x30] sm:$0xf]
        %v884 = vld [vmem:[%s268 + $0x34] sm:$0xf]
        %v885 = vld [vmem:[%s268 + $0x38] sm:$0xf]
        %v886 = vld [vmem:[%s268 + $0x3c] sm:$0xf]
        %v887 = vld [vmem:[%s268 + $0x40] sm:$0xf]
        %v888 = vld [vmem:[%s268 + $0x44] sm:$0xf]
        %v889 = vld [vmem:[%s268 + $0x48] sm:$0xf]
        %v890 = vld [vmem:[%s268 + $0x4c] sm:$0xf]
        %v891 = vld [vmem:[%s268 + $0x50] sm:$0xf]
        %v892 = vld [vmem:[%s268 + $0x54] sm:$0xf]
        %v893 = vld [vmem:[%s268 + $0x58] sm:$0xf]
        %v894 = vld [vmem:[%s268 + $0x5c] sm:$0xf]
        %v895 = vld [vmem:[%s268 + $0x60] sm:$0xf]
        %v896 = vld [vmem:[%s268 + $0x64] sm:$0xf]
        %v897 = vld [vmem:[%s268 + $0x68] sm:$0xf]
        %v898 = vld [vmem:[%s268 + $0x6c] sm:$0xf]
        %v899 = vld [vmem:[%s268 + $0x70] sm:$0xf]
        %v900 = vld [vmem:[%s268 + $0x74] sm:$0xf]
        %v901 = vld [vmem:[%s268 + $0x78] sm:$0xf]
        %v902 = vld [vmem:[%s268 + $0x7c] sm:$0xf]
        %v903 = vld [vmem:[#allocation2] sm:$0xff]
        %v904 = vld [vmem:[#allocation2 + $0x8] sm:$0xff]
        %v905 = vld [vmem:[#allocation2 + $0x10] sm:$0xff]
        %v906 = vld [vmem:[#allocation2 + $0x18] sm:$0xff]
        %v907 = vld [vmem:[#allocation2 + $0x20] sm:$0xff]
        %v908 = vld [vmem:[#allocation2 + $0x28] sm:$0xff]
        %v909 = vld [vmem:[#allocation2 + $0x30] sm:$0xff]
        %v910 = vld [vmem:[#allocation2 + $0x38] sm:$0xff]
        %v911 = vld [vmem:[#allocation2 + $0x40] sm:$0xff]
        %v912 = vld [vmem:[#allocation2 + $0x48] sm:$0xff]
        %v913 = vld [vmem:[#allocation2 + $0x50] sm:$0xff]
        %v914 = vld [vmem:[#allocation2 + $0x58] sm:$0xff]
        %v915 = vld [vmem:[#allocation2 + $0x60] sm:$0xff]
        %v916 = vld [vmem:[#allocation2 + $0x68] sm:$0xff]
        %v917 = vld [vmem:[#allocation2 + $0x70] sm:$0xff]
        %v918 = vld [vmem:[#allocation2 + $0x78] sm:$0xff]
        %v919 = vld [vmem:[#allocation2 + $0x80] sm:$0xff]
        %v920 = vld [vmem:[#allocation2 + $0x88] sm:$0xff]
        %v921 = vld [vmem:[#allocation2 + $0x90] sm:$0xff]
        %v922 = vld [vmem:[#allocation2 + $0x98] sm:$0xff]
        %v923 = vld [vmem:[#allocation2 + $0xa0] sm:$0xff]
        %v924 = vld [vmem:[#allocation2 + $0xa8] sm:$0xff]
        %v925 = vld [vmem:[#allocation2 + $0xb0] sm:$0xff]
        %v926 = vld [vmem:[#allocation2 + $0xb8] sm:$0xff]
        %v927 = vld [vmem:[#allocation2 + $0xc0] sm:$0xff]
        %v928 = vld [vmem:[#allocation2 + $0xc8] sm:$0xff]
        %v929 = vld [vmem:[#allocation2 + $0xd0] sm:$0xff]
        %v930 = vld [vmem:[#allocation2 + $0xd8] sm:$0xff]
        %v931 = vld [vmem:[#allocation2 + $0xe0] sm:$0xff]
        %v932 = vld [vmem:[#allocation2 + $0xe8] sm:$0xff]
        %v933 = vld [vmem:[#allocation2 + $0xf0] sm:$0xff]
        %v934 = vld [vmem:[#allocation2 + $0xf8] sm:$0xff]
        %v935 = vld [vmem:[#allocation2 + $0x100] sm:$0xff]
        %v936 = vld [vmem:[#allocation2 + $0x108] sm:$0xff]
        %v937 = vld [vmem:[#allocation2 + $0x110] sm:$0xff]
        %v938 = vld [vmem:[#allocation2 + $0x118] sm:$0xff]
        %v971 = vunpack.c.l.b16 %v871
        %v972 = vunpack.c.l.b16 %v872
        %v973 = vunpack.c.l.b16 %v873
        %v974 = vunpack.c.l.b16 %v874
        %v975 = vunpack.c.l.b16 %v875
        %v976 = vunpack.c.l.b16 %v876
        %v977 = vunpack.c.l.b16 %v877
        %v978 = vunpack.c.l.b16 %v878
        %v979 = vunpack.c.l.b16 %v879
        %v980 = vunpack.c.l.b16 %v880
        %v981 = vunpack.c.l.b16 %v881
        %v982 = vunpack.c.l.b16 %v882
        %v983 = vunpack.c.l.b16 %v883
        %v984 = vunpack.c.l.b16 %v884
        %v985 = vunpack.c.l.b16 %v885
        %v986 = vunpack.c.l.b16 %v886
        %v987 = vunpack.c.l.b16 %v887
        %v988 = vunpack.c.l.b16 %v888
        %v989 = vunpack.c.l.b16 %v889
        %v990 = vunpack.c.l.b16 %v890
        %v991 = vunpack.c.l.b16 %v891
        %v992 = vunpack.c.l.b16 %v892
        %v993 = vunpack.c.l.b16 %v893
        %v994 = vunpack.c.l.b16 %v894
        %v995 = vunpack.c.l.b16 %v895
        %v996 = vunpack.c.l.b16 %v896
        %v997 = vunpack.c.l.b16 %v897
        %v998 = vunpack.c.l.b16 %v898
        %v999 = vunpack.c.l.b16 %v899
        %v1000 = vunpack.c.l.b16 %v900
        %v1001 = vunpack.c.l.b16 %v901
        %v1002 = vunpack.c.l.b16 %v902
        %v1003 = vpack.c.b16 %v972, %v971
        %v1004 = vpack.c.b16 %v974, %v973
        %v1005 = vpack.c.b16 %v976, %v975
        %v1006 = vpack.c.b16 %v978, %v977
        %v1007 = vpack.c.b16 %v980, %v979
        %v1008 = vpack.c.b16 %v982, %v981
        %v1009 = vpack.c.b16 %v984, %v983
        %v1010 = vpack.c.b16 %v986, %v985
        %v1011 = vpack.c.b16 %v988, %v987
        %v1012 = vpack.c.b16 %v990, %v989
        %v1013 = vpack.c.b16 %v992, %v991
        %v1014 = vpack.c.b16 %v994, %v993
        %v1015 = vpack.c.b16 %v996, %v995
        %v1016 = vpack.c.b16 %v998, %v997
        %v1017 = vpack.c.b16 %v1000, %v999
        %v1018 = vpack.c.b16 %v1002, %v1001
        %vm1019 = vcmask 130048
        %v1021 = vsel %vm1019, %v1003, 0
        %v1024 = vsel %vm1019, %v1004, 0
        %v1027 = vsel %vm1019, %v1005, 0
        %v1030 = vsel %vm1019, %v1006, 0
        %v1033 = vsel %vm1019, %v1007, 0
        %v1036 = vsel %vm1019, %v1008, 0
        %v1039 = vsel %vm1019, %v1009, 0
        %v1042 = vsel %vm1019, %v1010, 0
        %v1045 = vsel %vm1019, %v1011, 0
        %v1048 = vsel %vm1019, %v1012, 0
        %v1051 = vsel %vm1019, %v1013, 0
        %v1054 = vsel %vm1019, %v1014, 0
        %v1057 = vsel %vm1019, %v1015, 0
        %v1060 = vsel %vm1019, %v1016, 0
        %v1063 = vsel %vm1019, %v1017, 0
        %v1066 = vsel %vm1019, %v1018, 0
        %1068 = vmatprep.subr.bf16.mxu0 %v904
        %1069 = vmatpush1.bf16.msra.mxu0 %v903
        %1070 = vmatprep.subr.bf16.mxu0 0
        %1071 = vmatpush1.bf16.msra.mxu0 0
        %1072 = vmatprep.subr.bf16.mxu0 0
        %1073 = vmatpush1.bf16.msra.mxu0 0
        %1074 = vmatprep.subr.bf16.mxu0 0
        %1075 = vmatpush1.bf16.msra.mxu0 0
        %1076 = vmatprep.subr.bf16.mxu0 0
        %1077 = vmatpush1.bf16.msra.mxu0 0
        %1078 = vmatprep.subr.bf16.mxu0 0
        %1079 = vmatpush1.bf16.msra.mxu0 0
        %1080 = vmatprep.subr.bf16.mxu0 0
        %1081 = vmatpush1.bf16.msra.mxu0 0
        %1082 = vmatprep.subr.bf16.mxu0 0
        %1083 = vmatpush1.bf16.msra.mxu0 0
        %1084 = vmatprep.subr.bf16.mxu0 0
        %1085 = vmatpush1.bf16.msra.mxu0 0
        %1086 = vmatprep.subr.bf16.mxu0 0
        %1087 = vmatpush1.bf16.msra.mxu0 0
        %1088 = vmatprep.subr.bf16.mxu0 0
        %1089 = vmatpush1.bf16.msra.mxu0 0
        %1090 = vmatprep.subr.bf16.mxu0 0
        %1091 = vmatpush1.bf16.msra.mxu0 0
        %1092 = vmatprep.subr.bf16.mxu0 0
        %1093 = vmatpush1.bf16.msra.mxu0 0
        %1094 = vmatprep.subr.bf16.mxu0 0
        %1095 = vmatpush1.bf16.msra.mxu0 0
        %1096 = vmatprep.subr.bf16.mxu0 0
        %1097 = vmatpush1.bf16.msra.mxu0 0
        %1098 = vmatprep.subr.bf16.mxu0 0
        %1099 = vmatpush1.bf16.msra.mxu0 0
        %1100 = vmatprep.mubr.bf16.mxu0 0
        %1101 = vmatmul.mubr.bf16.gmra.mrb[0].mxu0 %v1021
        %v1102 = vpop.f32.mrb[0].mxu0
        %v1103 = vadd.f32 0.0, %v1102
        %v1104 = vpop.f32.mrb[0].mxu0
        %v1105 = vadd.f32 0.0, %v1104
        %v1106 = vpop.f32.mrb[0].mxu0
        %v1107 = vadd.f32 0.0, %v1106
        %v1108 = vpop.f32.mrb[0].mxu0
        %v1109 = vadd.f32 0.0, %v1108
        %1110 = vmatprep.mubr.bf16.mxu0 0
        %1111 = vmatmul.mubr.bf16.gmra.mrb[0].mxu0 %v1024
        %v1112 = vpop.f32.mrb[0].mxu0
        %v1113 = vadd.f32 0.0, %v1112
        %v1114 = vpop.f32.mrb[0].mxu0
        %v1115 = vadd.f32 0.0, %v1114
        %v1116 = vpop.f32.mrb[0].mxu0
        %v1117 = vadd.f32 0.0, %v1116
        %v1118 = vpop.f32.mrb[0].mxu0
        %v1119 = vadd.f32 0.0, %v1118
        %1120 = vmatprep.mubr.bf16.mxu0 0
        %1121 = vmatmul.mubr.bf16.gmra.mrb[0].mxu0 %v1027
        %v1122 = vpop.f32.mrb[0].mxu0
        %v1123 = vadd.f32 0.0, %v1122
        %v1124 = vpop.f32.mrb[0].mxu0
        %v1125 = vadd.f32 0.0, %v1124
        %v1126 = vpop.f32.mrb[0].mxu0
        %v1127 = vadd.f32 0.0, %v1126
        %v1128 = vpop.f32.mrb[0].mxu0
        %v1129 = vadd.f32 0.0, %v1128
        %1130 = vmatprep.mubr.bf16.mxu0 0
        %1131 = vmatmul.mubr.bf16.gmra.mrb[0].mxu0 %v1030
        %v1132 = vpop.f32.mrb[0].mxu0
        %v1133 = vadd.f32 0.0, %v1132
        %v1134 = vpop.f32.mrb[0].mxu0
        %v1135 = vadd.f32 0.0, %v1134
        %v1136 = vpop.f32.mrb[0].mxu0
        %v1137 = vadd.f32 0.0, %v1136
        %v1138 = vpop.f32.mrb[0].mxu0
        %v1139 = vadd.f32 0.0, %v1138
        %1140 = vmatprep.mubr.bf16.mxu0 0
        %1141 = vmatmul.mubr.bf16.gmra.mrb[0].mxu0 %v1033
        %v1142 = vpop.f32.mrb[0].mxu0
        %v1143 = vadd.f32 0.0, %v1142
        %v1144 = vpop.f32.mrb[0].mxu0
        %v1145 = vadd.f32 0.0, %v1144
        %v1146 = vpop.f32.mrb[0].mxu0
        %v1147 = vadd.f32 0.0, %v1146
        %v1148 = vpop.f32.mrb[0].mxu0
        %v1149 = vadd.f32 0.0, %v1148
        %1150 = vmatprep.mubr.bf16.mxu0 0
        %1151 = vmatmul.mubr.bf16.gmra.mrb[0].mxu0 %v1036
        %v1152 = vpop.f32.mrb[0].mxu0
        %v1153 = vadd.f32 0.0, %v1152
        %v1154 = vpop.f32.mrb[0].mxu0
        %v1155 = vadd.f32 0.0, %v1154
        %v1156 = vpop.f32.mrb[0].mxu0
        %v1157 = vadd.f32 0.0, %v1156
        %v1158 = vpop.f32.mrb[0].mxu0
        %v1159 = vadd.f32 0.0, %v1158
        %1160 = vmatprep.mubr.bf16.mxu0 0
        %1161 = vmatmul.mubr.bf16.gmra.mrb[0].mxu0 %v1039
        %v1162 = vpop.f32.mrb[0].mxu0
        %v1163 = vadd.f32 0.0, %v1162
        %v1164 = vpop.f32.mrb[0].mxu0
        %v1165 = vadd.f32 0.0, %v1164
        %v1166 = vpop.f32.mrb[0].mxu0
        %v1167 = vadd.f32 0.0, %v1166
        %v1168 = vpop.f32.mrb[0].mxu0
        %v1169 = vadd.f32 0.0, %v1168
        %1170 = vmatprep.mubr.bf16.mxu0 0
        %1171 = vmatmul.mubr.bf16.gmra.mrb[0].mxu0 %v1042
        %v1172 = vpop.f32.mrb[0].mxu0
        %v1173 = vadd.f32 0.0, %v1172
        %v1174 = vpop.f32.mrb[0].mxu0
        %v1175 = vadd.f32 0.0, %v1174
        %v1176 = vpop.f32.mrb[0].mxu0
        %v1177 = vadd.f32 0.0, %v1176
        %v1178 = vpop.f32.mrb[0].mxu0
        %v1179 = vadd.f32 0.0, %v1178
        %1180 = vmatprep.mubr.bf16.mxu0 0
        %1181 = vmatmul.mubr.bf16.gmra.mrb[0].mxu0 %v1045
        %v1182 = vpop.f32.mrb[0].mxu0
        %v1183 = vadd.f32 0.0, %v1182
        %v1184 = vpop.f32.mrb[0].mxu0
        %v1185 = vadd.f32 0.0, %v1184
        %v1186 = vpop.f32.mrb[0].mxu0
        %v1187 = vadd.f32 0.0, %v1186
        %v1188 = vpop.f32.mrb[0].mxu0
        %v1189 = vadd.f32 0.0, %v1188
        %1190 = vmatprep.mubr.bf16.mxu0 0
        %1191 = vmatmul.mubr.bf16.gmra.mrb[0].mxu0 %v1048
        %v1192 = vpop.f32.mrb[0].mxu0
        %v1193 = vadd.f32 0.0, %v1192
        %v1194 = vpop.f32.mrb[0].mxu0
        %v1195 = vadd.f32 0.0, %v1194
        %v1196 = vpop.f32.mrb[0].mxu0
        %v1197 = vadd.f32 0.0, %v1196
        %v1198 = vpop.f32.mrb[0].mxu0
        %v1199 = vadd.f32 0.0, %v1198
        %1200 = vmatprep.mubr.bf16.mxu0 0
        %1201 = vmatmul.mubr.bf16.gmra.mrb[0].mxu0 %v1051
        %v1202 = vpop.f32.mrb[0].mxu0
        %v1203 = vadd.f32 0.0, %v1202
        %v1204 = vpop.f32.mrb[0].mxu0
        %v1205 = vadd.f32 0.0, %v1204
        %v1206 = vpop.f32.mrb[0].mxu0
        %v1207 = vadd.f32 0.0, %v1206
        %v1208 = vpop.f32.mrb[0].mxu0
        %v1209 = vadd.f32 0.0, %v1208
        %1210 = vmatprep.mubr.bf16.mxu0 0
        %1211 = vmatmul.mubr.bf16.gmra.mrb[0].mxu0 %v1054
        %v1212 = vpop.f32.mrb[0].mxu0
        %v1213 = vadd.f32 0.0, %v1212
        %v1214 = vpop.f32.mrb[0].mxu0
        %v1215 = vadd.f32 0.0, %v1214
        %v1216 = vpop.f32.mrb[0].mxu0
        %v1217 = vadd.f32 0.0, %v1216
        %v1218 = vpop.f32.mrb[0].mxu0
        %v1219 = vadd.f32 0.0, %v1218
        %1220 = vmatprep.mubr.bf16.mxu0 0
        %1221 = vmatmul.mubr.bf16.gmra.mrb[0].mxu0 %v1057
        %v1222 = vpop.f32.mrb[0].mxu0
        %v1223 = vadd.f32 0.0, %v1222
        %v1224 = vpop.f32.mrb[0].mxu0
        %v1225 = vadd.f32 0.0, %v1224
        %v1226 = vpop.f32.mrb[0].mxu0
        %v1227 = vadd.f32 0.0, %v1226
        %v1228 = vpop.f32.mrb[0].mxu0
        %v1229 = vadd.f32 0.0, %v1228
        %1230 = vmatprep.mubr.bf16.mxu0 0
        %1231 = vmatmul.mubr.bf16.gmra.mrb[0].mxu0 %v1060
        %v1232 = vpop.f32.mrb[0].mxu0
        %v1233 = vadd.f32 0.0, %v1232
        %v1234 = vpop.f32.mrb[0].mxu0
        %v1235 = vadd.f32 0.0, %v1234
        %v1236 = vpop.f32.mrb[0].mxu0
        %v1237 = vadd.f32 0.0, %v1236
        %v1238 = vpop.f32.mrb[0].mxu0
        %v1239 = vadd.f32 0.0, %v1238
        %1240 = vmatprep.mubr.bf16.mxu0 0
        %1241 = vmatmul.mubr.bf16.gmra.mrb[0].mxu0 %v1063
        %v1242 = vpop.f32.mrb[0].mxu0
        %v1243 = vadd.f32 0.0, %v1242
        %v1244 = vpop.f32.mrb[0].mxu0
        %v1245 = vadd.f32 0.0, %v1244
        %v1246 = vpop.f32.mrb[0].mxu0
        %v1247 = vadd.f32 0.0, %v1246
        %v1248 = vpop.f32.mrb[0].mxu0
        %v1249 = vadd.f32 0.0, %v1248
        %1250 = vmatprep.mubr.bf16.mxu0 0
        %1251 = vmatmul.mubr.bf16.gmra.mrb[0].mxu0 %v1066
        %v1252 = vpop.f32.mrb[0].mxu0
        %v1253 = vadd.f32 0.0, %v1252
        %v1254 = vpop.f32.mrb[0].mxu0
        %v1255 = vadd.f32 0.0, %v1254
        %v1256 = vpop.f32.mrb[0].mxu0
        %v1257 = vadd.f32 0.0, %v1256
        %v1258 = vpop.f32.mrb[0].mxu0
        %v1259 = vadd.f32 0.0, %v1258
        %1260 = vdwg.mxu0
        %1261 = vmatprep.subr.bf16.mxu0 %v906
        %1262 = vmatpush1.bf16.msra.mxu0 %v905
        %1263 = vmatprep.subr.bf16.mxu0 0
        %1264 = vmatpush1.bf16.msra.mxu0 0
        %1265 = vmatprep.subr.bf16.mxu0 0
        %1266 = vmatpush1.bf16.msra.mxu0 0
        %1267 = vmatprep.subr.bf16.mxu0 0
        %1268 = vmatpush1.bf16.msra.mxu0 0
        %1269 = vmatprep.subr.bf16.mxu0 0
        %1270 = vmatpush1.bf16.msra.mxu0 0
        %1271 = vmatprep.subr.bf16.mxu0 0
        %1272 = vmatpush1.bf16.msra.mxu0 0
        %1273 = vmatprep.subr.bf16.mxu0 0
        %1274 = vmatpush1.bf16.msra.mxu0 0
        %1275 = vmatprep.subr.bf16.mxu0 0
        %1276 = vmatpush1.bf16.msra.mxu0 0
        %1277 = vmatprep.subr.bf16.mxu0 0
        %1278 = vmatpush1.bf16.msra.mxu0 0
        %1279 = vmatprep.subr.bf16.mxu0 0
        %1280 = vmatpush1.bf16.msra.mxu0 0
        %1281 = vmatprep.subr.bf16.mxu0 0
        %1282 = vmatpush1.bf16.msra.mxu0 0
        %1283 = vmatprep.subr.bf16.mxu0 0
        %1284 = vmatpush1.bf16.msra.mxu0 0
        %1285 = vmatprep.subr.bf16.mxu0 0
        %1286 = vmatpush1.bf16.msra.mxu0 0
        %1287 = vmatprep.subr.bf16.mxu0 0
        %1288 = vmatpush1.bf16.msra.mxu0 0
        %1289 = vmatprep.subr.bf16.mxu0 0
        %1290 = vmatpush1.bf16.msra.mxu0 0
        %1291 = vmatprep.subr.bf16.mxu0 0
        %1292 = vmatpush1.bf16.msra.mxu0 0
        %1293 = vmatprep.mubr.bf16.mxu0 0
        %1294 = vmatmul.mubr.bf16.gmra.mrb[0].mxu0 %v1021
        %v1295 = vpop.f32.mrb[0].mxu0
        %v1296 = vadd.f32 0.0, %v1295
        %v1297 = vpop.f32.mrb[0].mxu0
        %v1298 = vadd.f32 0.0, %v1297
        %v1299 = vpop.f32.mrb[0].mxu0
        %v1300 = vadd.f32 0.0, %v1299
        %v1301 = vpop.f32.mrb[0].mxu0
        %v1302 = vadd.f32 0.0, %v1301
        %1303 = vmatprep.mubr.bf16.mxu0 0
        %1304 = vmatmul.mubr.bf16.gmra.mrb[0].mxu0 %v1024
        %v1305 = vpop.f32.mrb[0].mxu0
        %v1306 = vadd.f32 0.0, %v1305
        %v1307 = vpop.f32.mrb[0].mxu0
        %v1308 = vadd.f32 0.0, %v1307
        %v1309 = vpop.f32.mrb[0].mxu0
        %v1310 = vadd.f32 0.0, %v1309
        %v1311 = vpop.f32.mrb[0].mxu0
        %v1312 = vadd.f32 0.0, %v1311
        %1313 = vmatprep.mubr.bf16.mxu0 0
        %1314 = vmatmul.mubr.bf16.gmra.mrb[0].mxu0 %v1027
        %v1315 = vpop.f32.mrb[0].mxu0
        %v1316 = vadd.f32 0.0, %v1315
        %v1317 = vpop.f32.mrb[0].mxu0
        %v1318 = vadd.f32 0.0, %v1317
        %v1319 = vpop.f32.mrb[0].mxu0
        %v1320 = vadd.f32 0.0, %v1319
        %v1321 = vpop.f32.mrb[0].mxu0
        %v1322 = vadd.f32 0.0, %v1321
        %1323 = vmatprep.mubr.bf16.mxu0 0
        %1324 = vmatmul.mubr.bf16.gmra.mrb[0].mxu0 %v1030
        %v1325 = vpop.f32.mrb[0].mxu0
        %v1326 = vadd.f32 0.0, %v1325
        %v1327 = vpop.f32.mrb[0].mxu0
        %v1328 = vadd.f32 0.0, %v1327
        %v1329 = vpop.f32.mrb[0].mxu0
        %v1330 = vadd.f32 0.0, %v1329
        %v1331 = vpop.f32.mrb[0].mxu0
        %v1332 = vadd.f32 0.0, %v1331
        %1333 = vmatprep.mubr.bf16.mxu0 0
        %1334 = vmatmul.mubr.bf16.gmra.mrb[0].mxu0 %v1033
        %v1335 = vpop.f32.mrb[0].mxu0
        %v1336 = vadd.f32 0.0, %v1335
        %v1337 = vpop.f32.mrb[0].mxu0
        %v1338 = vadd.f32 0.0, %v1337
        %v1339 = vpop.f32.mrb[0].mxu0
        %v1340 = vadd.f32 0.0, %v1339
        %v1341 = vpop.f32.mrb[0].mxu0
        %v1342 = vadd.f32 0.0, %v1341
        %1343 = vmatprep.mubr.bf16.mxu0 0
        %1344 = vmatmul.mubr.bf16.gmra.mrb[0].mxu0 %v1036
        %v1345 = vpop.f32.mrb[0].mxu0
        %v1346 = vadd.f32 0.0, %v1345
        %v1347 = vpop.f32.mrb[0].mxu0
        %v1348 = vadd.f32 0.0, %v1347
        %v1349 = vpop.f32.mrb[0].mxu0
        %v1350 = vadd.f32 0.0, %v1349
        %v1351 = vpop.f32.mrb[0].mxu0
        %v1352 = vadd.f32 0.0, %v1351
        %1353 = vmatprep.mubr.bf16.mxu0 0
        %1354 = vmatmul.mubr.bf16.gmra.mrb[0].mxu0 %v1039
        %v1355 = vpop.f32.mrb[0].mxu0
        %v1356 = vadd.f32 0.0, %v1355
        %v1357 = vpop.f32.mrb[0].mxu0
        %v1358 = vadd.f32 0.0, %v1357
        %v1359 = vpop.f32.mrb[0].mxu0
        %v1360 = vadd.f32 0.0, %v1359
        %v1361 = vpop.f32.mrb[0].mxu0
        %v1362 = vadd.f32 0.0, %v1361
        %1363 = vmatprep.mubr.bf16.mxu0 0
        %1364 = vmatmul.mubr.bf16.gmra.mrb[0].mxu0 %v1042
        %v1365 = vpop.f32.mrb[0].mxu0
        %v1366 = vadd.f32 0.0, %v1365
        %v1367 = vpop.f32.mrb[0].mxu0
        %v1368 = vadd.f32 0.0, %v1367
        %v1369 = vpop.f32.mrb[0].mxu0
        %v1370 = vadd.f32 0.0, %v1369
        %v1371 = vpop.f32.mrb[0].mxu0
        %v1372 = vadd.f32 0.0, %v1371
        %1373 = vmatprep.mubr.bf16.mxu0 0
        %1374 = vmatmul.mubr.bf16.gmra.mrb[0].mxu0 %v1045
        %v1375 = vpop.f32.mrb[0].mxu0
        %v1376 = vadd.f32 0.0, %v1375
        %v1377 = vpop.f32.mrb[0].mxu0
        %v1378 = vadd.f32 0.0, %v1377
        %v1379 = vpop.f32.mrb[0].mxu0
        %v1380 = vadd.f32 0.0, %v1379
        %v1381 = vpop.f32.mrb[0].mxu0
        %v1382 = vadd.f32 0.0, %v1381
        %1383 = vmatprep.mubr.bf16.mxu0 0
        %1384 = vmatmul.mubr.bf16.gmra.mrb[0].mxu0 %v1048
        %v1385 = vpop.f32.mrb[0].mxu0
        %v1386 = vadd.f32 0.0, %v1385
        %v1387 = vpop.f32.mrb[0].mxu0
        %v1388 = vadd.f32 0.0, %v1387
        %v1389 = vpop.f32.mrb[0].mxu0
        %v1390 = vadd.f32 0.0, %v1389
        %v1391 = vpop.f32.mrb[0].mxu0
        %v1392 = vadd.f32 0.0, %v1391
        %1393 = vmatprep.mubr.bf16.mxu0 0
        %1394 = vmatmul.mubr.bf16.gmra.mrb[0].mxu0 %v1051
        %v1395 = vpop.f32.mrb[0].mxu0
        %v1396 = vadd.f32 0.0, %v1395
        %v1397 = vpop.f32.mrb[0].mxu0
        %v1398 = vadd.f32 0.0, %v1397
        %v1399 = vpop.f32.mrb[0].mxu0
        %v1400 = vadd.f32 0.0, %v1399
        %v1401 = vpop.f32.mrb[0].mxu0
        %v1402 = vadd.f32 0.0, %v1401
        %1403 = vmatprep.mubr.bf16.mxu0 0
        %1404 = vmatmul.mubr.bf16.gmra.mrb[0].mxu0 %v1054
        %v1405 = vpop.f32.mrb[0].mxu0
        %v1406 = vadd.f32 0.0, %v1405
        %v1407 = vpop.f32.mrb[0].mxu0
        %v1408 = vadd.f32 0.0, %v1407
        %v1409 = vpop.f32.mrb[0].mxu0
        %v1410 = vadd.f32 0.0, %v1409
        %v1411 = vpop.f32.mrb[0].mxu0
        %v1412 = vadd.f32 0.0, %v1411
        %1413 = vmatprep.mubr.bf16.mxu0 0
        %1414 = vmatmul.mubr.bf16.gmra.mrb[0].mxu0 %v1057
        %v1415 = vpop.f32.mrb[0].mxu0
        %v1416 = vadd.f32 0.0, %v1415
        %v1417 = vpop.f32.mrb[0].mxu0
        %v1418 = vadd.f32 0.0, %v1417
        %v1419 = vpop.f32.mrb[0].mxu0
        %v1420 = vadd.f32 0.0, %v1419
        %v1421 = vpop.f32.mrb[0].mxu0
        %v1422 = vadd.f32 0.0, %v1421
        %1423 = vmatprep.mubr.bf16.mxu0 0
        %1424 = vmatmul.mubr.bf16.gmra.mrb[0].mxu0 %v1060
        %v1425 = vpop.f32.mrb[0].mxu0
        %v1426 = vadd.f32 0.0, %v1425
        %v1427 = vpop.f32.mrb[0].mxu0
        %v1428 = vadd.f32 0.0, %v1427
        %v1429 = vpop.f32.mrb[0].mxu0
        %v1430 = vadd.f32 0.0, %v1429
        %v1431 = vpop.f32.mrb[0].mxu0
        %v1432 = vadd.f32 0.0, %v1431
        %1433 = vmatprep.mubr.bf16.mxu0 0
        %1434 = vmatmul.mubr.bf16.gmra.mrb[0].mxu0 %v1063
        %v1435 = vpop.f32.mrb[0].mxu0
        %v1436 = vadd.f32 0.0, %v1435
        %v1437 = vpop.f32.mrb[0].mxu0
        %v1438 = vadd.f32 0.0, %v1437
        %v1439 = vpop.f32.mrb[0].mxu0
        %v1440 = vadd.f32 0.0, %v1439
        %v1441 = vpop.f32.mrb[0].mxu0
        %v1442 = vadd.f32 0.0, %v1441
        %1443 = vmatprep.mubr.bf16.mxu0 0
        %1444 = vmatmul.mubr.bf16.gmra.mrb[0].mxu0 %v1066
        %v1445 = vpop.f32.mrb[0].mxu0
        %v1446 = vadd.f32 0.0, %v1445
        %v1447 = vpop.f32.mrb[0].mxu0
        %v1448 = vadd.f32 0.0, %v1447
        %v1449 = vpop.f32.mrb[0].mxu0
        %v1450 = vadd.f32 0.0, %v1449
        %v1451 = vpop.f32.mrb[0].mxu0
        %v1452 = vadd.f32 0.0, %v1451
        %1453 = vdwg.mxu0
        %v1454 = vmax.f32 %v1103, %v1105
        %v1455 = vmax.f32 %v1454, %v1296
        %v1456 = vmax.f32 %v1455, %v1298
        %1457 = vmax.xlane.f32.xlu0 %v1456
        %v1458 = vpop.xlane.xlu0 %1457
        %v1459 = vmax.f32 %v1107, %v1109
        %v1460 = vmax.f32 %v1459, %v1300
        %v1461 = vmax.f32 %v1460, %v1302
        %1462 = vmax.xlane.f32.xlu0 %v1461
        %v1463 = vpop.xlane.xlu0 %1462
        %v1464 = vmax.f32 %v1113, %v1115
        %v1465 = vmax.f32 %v1464, %v1306
        %v1466 = vmax.f32 %v1465, %v1308
        %1467 = vmax.xlane.f32.xlu0 %v1466
        %v1468 = vpop.xlane.xlu0 %1467
        %v1469 = vmax.f32 %v1117, %v1119
        %v1470 = vmax.f32 %v1469, %v1310
        %v1471 = vmax.f32 %v1470, %v1312
        %1472 = vmax.xlane.f32.xlu0 %v1471
        %v1473 = vpop.xlane.xlu0 %1472
        %v1474 = vmax.f32 %v1123, %v1125
        %v1475 = vmax.f32 %v1474, %v1316
        %v1476 = vmax.f32 %v1475, %v1318
        %1477 = vmax.xlane.f32.xlu0 %v1476
        %v1478 = vpop.xlane.xlu0 %1477
        %v1479 = vmax.f32 %v1127, %v1129
        %v1480 = vmax.f32 %v1479, %v1320
        %v1481 = vmax.f32 %v1480, %v1322
        %1482 = vmax.xlane.f32.xlu0 %v1481
        %v1483 = vpop.xlane.xlu0 %1482
        %v1484 = vmax.f32 %v1133, %v1135
        %v1485 = vmax.f32 %v1484, %v1326
        %v1486 = vmax.f32 %v1485, %v1328
        %1487 = vmax.xlane.f32.xlu0 %v1486
        %v1488 = vpop.xlane.xlu0 %1487
        %v1489 = vmax.f32 %v1137, %v1139
        %v1490 = vmax.f32 %v1489, %v1330
        %v1491 = vmax.f32 %v1490, %v1332
        %1492 = vmax.xlane.f32.xlu0 %v1491
        %v1493 = vpop.xlane.xlu0 %1492
        %v1494 = vmax.f32 %v1143, %v1145
        %v1495 = vmax.f32 %v1494, %v1336
        %v1496 = vmax.f32 %v1495, %v1338
        %1497 = vmax.xlane.f32.xlu0 %v1496
        %v1498 = vpop.xlane.xlu0 %1497
        %v1499 = vmax.f32 %v1147, %v1149
        %v1500 = vmax.f32 %v1499, %v1340
        %v1501 = vmax.f32 %v1500, %v1342
        %1502 = vmax.xlane.f32.xlu0 %v1501
        %v1503 = vpop.xlane.xlu0 %1502
        %v1504 = vmax.f32 %v1153, %v1155
        %v1505 = vmax.f32 %v1504, %v1346
        %v1506 = vmax.f32 %v1505, %v1348
        %1507 = vmax.xlane.f32.xlu0 %v1506
        %v1508 = vpop.xlane.xlu0 %1507
        %v1509 = vmax.f32 %v1157, %v1159
        %v1510 = vmax.f32 %v1509, %v1350
        %v1511 = vmax.f32 %v1510, %v1352
        %1512 = vmax.xlane.f32.xlu0 %v1511
        %v1513 = vpop.xlane.xlu0 %1512
        %v1514 = vmax.f32 %v1163, %v1165
        %v1515 = vmax.f32 %v1514, %v1356
        %v1516 = vmax.f32 %v1515, %v1358
        %1517 = vmax.xlane.f32.xlu0 %v1516
        %v1518 = vpop.xlane.xlu0 %1517
        %v1519 = vmax.f32 %v1167, %v1169
        %v1520 = vmax.f32 %v1519, %v1360
        %v1521 = vmax.f32 %v1520, %v1362
        %1522 = vmax.xlane.f32.xlu0 %v1521
        %v1523 = vpop.xlane.xlu0 %1522
        %v1524 = vmax.f32 %v1173, %v1175
        %v1525 = vmax.f32 %v1524, %v1366
        %v1526 = vmax.f32 %v1525, %v1368
        %1527 = vmax.xlane.f32.xlu0 %v1526
        %v1528 = vpop.xlane.xlu0 %1527
        %v1529 = vmax.f32 %v1177, %v1179
        %v1530 = vmax.f32 %v1529, %v1370
        %v1531 = vmax.f32 %v1530, %v1372
        %1532 = vmax.xlane.f32.xlu0 %v1531
        %v1533 = vpop.xlane.xlu0 %1532
        %v1534 = vmax.f32 %v1183, %v1185
        %v1535 = vmax.f32 %v1534, %v1376
        %v1536 = vmax.f32 %v1535, %v1378
        %1537 = vmax.xlane.f32.xlu0 %v1536
        %v1538 = vpop.xlane.xlu0 %1537
        %v1539 = vmax.f32 %v1187, %v1189
        %v1540 = vmax.f32 %v1539, %v1380
        %v1541 = vmax.f32 %v1540, %v1382
        %1542 = vmax.xlane.f32.xlu0 %v1541
        %v1543 = vpop.xlane.xlu0 %1542
        %v1544 = vmax.f32 %v1193, %v1195
        %v1545 = vmax.f32 %v1544, %v1386
        %v1546 = vmax.f32 %v1545, %v1388
        %1547 = vmax.xlane.f32.xlu0 %v1546
        %v1548 = vpop.xlane.xlu0 %1547
        %v1549 = vmax.f32 %v1197, %v1199
        %v1550 = vmax.f32 %v1549, %v1390
        %v1551 = vmax.f32 %v1550, %v1392
        %1552 = vmax.xlane.f32.xlu0 %v1551
        %v1553 = vpop.xlane.xlu0 %1552
        %v1554 = vmax.f32 %v1203, %v1205
        %v1555 = vmax.f32 %v1554, %v1396
        %v1556 = vmax.f32 %v1555, %v1398
        %1557 = vmax.xlane.f32.xlu0 %v1556
        %v1558 = vpop.xlane.xlu0 %1557
        %v1559 = vmax.f32 %v1207, %v1209
        %v1560 = vmax.f32 %v1559, %v1400
        %v1561 = vmax.f32 %v1560, %v1402
        %1562 = vmax.xlane.f32.xlu0 %v1561
        %v1563 = vpop.xlane.xlu0 %1562
        %v1564 = vmax.f32 %v1213, %v1215
        %v1565 = vmax.f32 %v1564, %v1406
        %v1566 = vmax.f32 %v1565, %v1408
        %1567 = vmax.xlane.f32.xlu0 %v1566
        %v1568 = vpop.xlane.xlu0 %1567
        %v1569 = vmax.f32 %v1217, %v1219
        %v1570 = vmax.f32 %v1569, %v1410
        %v1571 = vmax.f32 %v1570, %v1412
        %1572 = vmax.xlane.f32.xlu0 %v1571
        %v1573 = vpop.xlane.xlu0 %1572
        %v1574 = vmax.f32 %v1223, %v1225
        %v1575 = vmax.f32 %v1574, %v1416
        %v1576 = vmax.f32 %v1575, %v1418
        %1577 = vmax.xlane.f32.xlu0 %v1576
        %v1578 = vpop.xlane.xlu0 %1577
        %v1579 = vmax.f32 %v1227, %v1229
        %v1580 = vmax.f32 %v1579, %v1420
        %v1581 = vmax.f32 %v1580, %v1422
        %1582 = vmax.xlane.f32.xlu0 %v1581
        %v1583 = vpop.xlane.xlu0 %1582
        %v1584 = vmax.f32 %v1233, %v1235
        %v1585 = vmax.f32 %v1584, %v1426
        %v1586 = vmax.f32 %v1585, %v1428
        %1587 = vmax.xlane.f32.xlu0 %v1586
        %v1588 = vpop.xlane.xlu0 %1587
        %v1589 = vmax.f32 %v1237, %v1239
        %v1590 = vmax.f32 %v1589, %v1430
        %v1591 = vmax.f32 %v1590, %v1432
        %1592 = vmax.xlane.f32.xlu0 %v1591
        %v1593 = vpop.xlane.xlu0 %1592
        %v1594 = vmax.f32 %v1243, %v1245
        %v1595 = vmax.f32 %v1594, %v1436
        %v1596 = vmax.f32 %v1595, %v1438
        %1597 = vmax.xlane.f32.xlu0 %v1596
        %v1598 = vpop.xlane.xlu0 %1597
        %v1599 = vmax.f32 %v1247, %v1249
        %v1600 = vmax.f32 %v1599, %v1440
        %v1601 = vmax.f32 %v1600, %v1442
        %1602 = vmax.xlane.f32.xlu0 %v1601
        %v1603 = vpop.xlane.xlu0 %1602
        %v1604 = vmax.f32 %v1253, %v1255
        %v1605 = vmax.f32 %v1604, %v1446
        %v1606 = vmax.f32 %v1605, %v1448
        %1607 = vmax.xlane.f32.xlu0 %v1606
        %v1608 = vpop.xlane.xlu0 %1607
        %v1609 = vmax.f32 %v1257, %v1259
        %v1610 = vmax.f32 %v1609, %v1450
        %v1611 = vmax.f32 %v1610, %v1452
        %1612 = vmax.xlane.f32.xlu0 %v1611
        %v1613 = vpop.xlane.xlu0 %1612
        %v1614 = vsub.f32 %v1103, %v1458
        %v1615 = vsub.f32 %v1105, %v1458
        %v1616 = vsub.f32 %v1296, %v1458
        %v1617 = vsub.f32 %v1298, %v1458
        %v1618 = vsub.f32 %v1107, %v1463
        %v1619 = vsub.f32 %v1109, %v1463
        %v1620 = vsub.f32 %v1300, %v1463
        %v1621 = vsub.f32 %v1302, %v1463
        %v1622 = vsub.f32 %v1113, %v1468
        %v1623 = vsub.f32 %v1115, %v1468
        %v1624 = vsub.f32 %v1306, %v1468
        %v1625 = vsub.f32 %v1308, %v1468
        %v1626 = vsub.f32 %v1117, %v1473
        %v1627 = vsub.f32 %v1119, %v1473
        %v1628 = vsub.f32 %v1310, %v1473
        %v1629 = vsub.f32 %v1312, %v1473
        %v1630 = vsub.f32 %v1123, %v1478
        %v1631 = vsub.f32 %v1125, %v1478
        %v1632 = vsub.f32 %v1316, %v1478
        %v1633 = vsub.f32 %v1318, %v1478
        %v1634 = vsub.f32 %v1127, %v1483
        %v1635 = vsub.f32 %v1129, %v1483
        %v1636 = vsub.f32 %v1320, %v1483
        %v1637 = vsub.f32 %v1322, %v1483
        %v1638 = vsub.f32 %v1133, %v1488
        %v1639 = vsub.f32 %v1135, %v1488
        %v1640 = vsub.f32 %v1326, %v1488
        %v1641 = vsub.f32 %v1328, %v1488
        %v1642 = vsub.f32 %v1137, %v1493
        %v1643 = vsub.f32 %v1139, %v1493
        %v1644 = vsub.f32 %v1330, %v1493
        %v1645 = vsub.f32 %v1332, %v1493
        %v1646 = vsub.f32 %v1143, %v1498
        %v1647 = vsub.f32 %v1145, %v1498
        %v1648 = vsub.f32 %v1336, %v1498
        %v1649 = vsub.f32 %v1338, %v1498
        %v1650 = vsub.f32 %v1147, %v1503
        %v1651 = vsub.f32 %v1149, %v1503
        %v1652 = vsub.f32 %v1340, %v1503
        %v1653 = vsub.f32 %v1342, %v1503
        %v1654 = vsub.f32 %v1153, %v1508
        %v1655 = vsub.f32 %v1155, %v1508
        %v1656 = vsub.f32 %v1346, %v1508
        %v1657 = vsub.f32 %v1348, %v1508
        %v1658 = vsub.f32 %v1157, %v1513
        %v1659 = vsub.f32 %v1159, %v1513
        %v1660 = vsub.f32 %v1350, %v1513
        %v1661 = vsub.f32 %v1352, %v1513
        %v1662 = vsub.f32 %v1163, %v1518
        %v1663 = vsub.f32 %v1165, %v1518
        %v1664 = vsub.f32 %v1356, %v1518
        %v1665 = vsub.f32 %v1358, %v1518
        %v1666 = vsub.f32 %v1167, %v1523
        %v1667 = vsub.f32 %v1169, %v1523
        %v1668 = vsub.f32 %v1360, %v1523
        %v1669 = vsub.f32 %v1362, %v1523
        %v1670 = vsub.f32 %v1173, %v1528
        %v1671 = vsub.f32 %v1175, %v1528
        %v1672 = vsub.f32 %v1366, %v1528
        %v1673 = vsub.f32 %v1368, %v1528
        %v1674 = vsub.f32 %v1177, %v1533
        %v1675 = vsub.f32 %v1179, %v1533
        %v1676 = vsub.f32 %v1370, %v1533
        %v1677 = vsub.f32 %v1372, %v1533
        %v1678 = vsub.f32 %v1183, %v1538
        %v1679 = vsub.f32 %v1185, %v1538
        %v1680 = vsub.f32 %v1376, %v1538
        %v1681 = vsub.f32 %v1378, %v1538
        %v1682 = vsub.f32 %v1187, %v1543
        %v1683 = vsub.f32 %v1189, %v1543
        %v1684 = vsub.f32 %v1380, %v1543
        %v1685 = vsub.f32 %v1382, %v1543
        %v1686 = vsub.f32 %v1193, %v1548
        %v1687 = vsub.f32 %v1195, %v1548
        %v1688 = vsub.f32 %v1386, %v1548
        %v1689 = vsub.f32 %v1388, %v1548
        %v1690 = vsub.f32 %v1197, %v1553
        %v1691 = vsub.f32 %v1199, %v1553
        %v1692 = vsub.f32 %v1390, %v1553
        %v1693 = vsub.f32 %v1392, %v1553
        %v1694 = vsub.f32 %v1203, %v1558
        %v1695 = vsub.f32 %v1205, %v1558
        %v1696 = vsub.f32 %v1396, %v1558
        %v1697 = vsub.f32 %v1398, %v1558
        %v1698 = vsub.f32 %v1207, %v1563
        %v1699 = vsub.f32 %v1209, %v1563
        %v1700 = vsub.f32 %v1400, %v1563
        %v1701 = vsub.f32 %v1402, %v1563
        %v1702 = vsub.f32 %v1213, %v1568
        %v1703 = vsub.f32 %v1215, %v1568
        %v1704 = vsub.f32 %v1406, %v1568
        %v1705 = vsub.f32 %v1408, %v1568
        %v1706 = vsub.f32 %v1217, %v1573
        %v1707 = vsub.f32 %v1219, %v1573
        %v1708 = vsub.f32 %v1410, %v1573
        %v1709 = vsub.f32 %v1412, %v1573
        %v1710 = vsub.f32 %v1223, %v1578
        %v1711 = vsub.f32 %v1225, %v1578
        %v1712 = vsub.f32 %v1416, %v1578
        %v1713 = vsub.f32 %v1418, %v1578
        %v1714 = vsub.f32 %v1227, %v1583
        %v1715 = vsub.f32 %v1229, %v1583
        %v1716 = vsub.f32 %v1420, %v1583
        %v1717 = vsub.f32 %v1422, %v1583
        %v1718 = vsub.f32 %v1233, %v1588
        %v1719 = vsub.f32 %v1235, %v1588
        %v1720 = vsub.f32 %v1426, %v1588
        %v1721 = vsub.f32 %v1428, %v1588
        %v1722 = vsub.f32 %v1237, %v1593
        %v1723 = vsub.f32 %v1239, %v1593
        %v1724 = vsub.f32 %v1430, %v1593
        %v1725 = vsub.f32 %v1432, %v1593
        %v1726 = vsub.f32 %v1243, %v1598
        %v1727 = vsub.f32 %v1245, %v1598
        %v1728 = vsub.f32 %v1436, %v1598
        %v1729 = vsub.f32 %v1438, %v1598
        %v1730 = vsub.f32 %v1247, %v1603
        %v1731 = vsub.f32 %v1249, %v1603
        %v1732 = vsub.f32 %v1440, %v1603
        %v1733 = vsub.f32 %v1442, %v1603
        %v1734 = vsub.f32 %v1253, %v1608
        %v1735 = vsub.f32 %v1255, %v1608
        %v1736 = vsub.f32 %v1446, %v1608
        %v1737 = vsub.f32 %v1448, %v1608
        %v1738 = vsub.f32 %v1257, %v1613
        %v1739 = vsub.f32 %v1259, %v1613
        %v1740 = vsub.f32 %v1450, %v1613
        %v1741 = vsub.f32 %v1452, %v1613
        %v1742 = vpack.c.bf16 %v1618, %v1614
        %v1743 = vpack.c.bf16 %v1619, %v1615
        %v1744 = vpack.c.bf16 %v1620, %v1616
        %v1745 = vpack.c.bf16 %v1621, %v1617
        %v1746 = vpack.c.bf16 %v1626, %v1622
        %v1747 = vpack.c.bf16 %v1627, %v1623
        %v1748 = vpack.c.bf16 %v1628, %v1624
        %v1749 = vpack.c.bf16 %v1629, %v1625
        %v1750 = vpack.c.bf16 %v1634, %v1630
        %v1751 = vpack.c.bf16 %v1635, %v1631
        %v1752 = vpack.c.bf16 %v1636, %v1632
        %v1753 = vpack.c.bf16 %v1637, %v1633
        %v1754 = vpack.c.bf16 %v1642, %v1638
        %v1755 = vpack.c.bf16 %v1643, %v1639
        %v1756 = vpack.c.bf16 %v1644, %v1640
        %v1757 = vpack.c.bf16 %v1645, %v1641
        %v1758 = vpack.c.bf16 %v1650, %v1646
        %v1759 = vpack.c.bf16 %v1651, %v1647
        %v1760 = vpack.c.bf16 %v1652, %v1648
        %v1761 = vpack.c.bf16 %v1653, %v1649
        %v1762 = vpack.c.bf16 %v1658, %v1654
        %v1763 = vpack.c.bf16 %v1659, %v1655
        %v1764 = vpack.c.bf16 %v1660, %v1656
        %v1765 = vpack.c.bf16 %v1661, %v1657
        %v1766 = vpack.c.bf16 %v1666, %v1662
        %v1767 = vpack.c.bf16 %v1667, %v1663
        %v1768 = vpack.c.bf16 %v1668, %v1664
        %v1769 = vpack.c.bf16 %v1669, %v1665
        %v1770 = vpack.c.bf16 %v1674, %v1670
        %v1771 = vpack.c.bf16 %v1675, %v1671
        %v1772 = vpack.c.bf16 %v1676, %v1672
        %v1773 = vpack.c.bf16 %v1677, %v1673
        %v1774 = vpack.c.bf16 %v1682, %v1678
        %v1775 = vpack.c.bf16 %v1683, %v1679
        %v1776 = vpack.c.bf16 %v1684, %v1680
        %v1777 = vpack.c.bf16 %v1685, %v1681
        %v1778 = vpack.c.bf16 %v1690, %v1686
        %v1779 = vpack.c.bf16 %v1691, %v1687
        %v1780 = vpack.c.bf16 %v1692, %v1688
        %v1781 = vpack.c.bf16 %v1693, %v1689
        %v1782 = vpack.c.bf16 %v1698, %v1694
        %v1783 = vpack.c.bf16 %v1699, %v1695
        %v1784 = vpack.c.bf16 %v1700, %v1696
        %v1785 = vpack.c.bf16 %v1701, %v1697
        %v1786 = vpack.c.bf16 %v1706, %v1702
        %v1787 = vpack.c.bf16 %v1707, %v1703
        %v1788 = vpack.c.bf16 %v1708, %v1704
        %v1789 = vpack.c.bf16 %v1709, %v1705
        %v1790 = vpack.c.bf16 %v1714, %v1710
        %v1791 = vpack.c.bf16 %v1715, %v1711
        %v1792 = vpack.c.bf16 %v1716, %v1712
        %v1793 = vpack.c.bf16 %v1717, %v1713
        %v1794 = vpack.c.bf16 %v1722, %v1718
        %v1795 = vpack.c.bf16 %v1723, %v1719
        %v1796 = vpack.c.bf16 %v1724, %v1720
        %v1797 = vpack.c.bf16 %v1725, %v1721
        %v1798 = vpack.c.bf16 %v1730, %v1726
        %v1799 = vpack.c.bf16 %v1731, %v1727
        %v1800 = vpack.c.bf16 %v1732, %v1728
        %v1801 = vpack.c.bf16 %v1733, %v1729
        %v1802 = vpack.c.bf16 %v1738, %v1734
        %v1803 = vpack.c.bf16 %v1739, %v1735
        %v1804 = vpack.c.bf16 %v1740, %v1736
        %v1805 = vpack.c.bf16 %v1741, %v1737
        %v1807 = vmul.bf16 %v1742, 1069105081
        %v1808 = vpow.bf16.pop %v1807
        %v1810 = vmul.bf16 %v1743, 1069105081
        %v1811 = vpow.bf16.pop %v1810
        %v1813 = vmul.bf16 %v1744, 1069105081
        %v1814 = vpow.bf16.pop %v1813
        %v1816 = vmul.bf16 %v1745, 1069105081
        %v1817 = vpow.bf16.pop %v1816
        %v1819 = vmul.bf16 %v1746, 1069105081
        %v1820 = vpow.bf16.pop %v1819
        %v1822 = vmul.bf16 %v1747, 1069105081
        %v1823 = vpow.bf16.pop %v1822
        %v1825 = vmul.bf16 %v1748, 1069105081
        %v1826 = vpow.bf16.pop %v1825
        %v1828 = vmul.bf16 %v1749, 1069105081
        %v1829 = vpow.bf16.pop %v1828
        %v1831 = vmul.bf16 %v1750, 1069105081
        %v1832 = vpow.bf16.pop %v1831
        %v1834 = vmul.bf16 %v1751, 1069105081
        %v1835 = vpow.bf16.pop %v1834
        %v1837 = vmul.bf16 %v1752, 1069105081
        %v1838 = vpow.bf16.pop %v1837
        %v1840 = vmul.bf16 %v1753, 1069105081
        %v1841 = vpow.bf16.pop %v1840
        %v1843 = vmul.bf16 %v1754, 1069105081
        %v1844 = vpow.bf16.pop %v1843
        %v1846 = vmul.bf16 %v1755, 1069105081
        %v1847 = vpow.bf16.pop %v1846
        %v1849 = vmul.bf16 %v1756, 1069105081
        %v1850 = vpow.bf16.pop %v1849
        %v1852 = vmul.bf16 %v1757, 1069105081
        %v1853 = vpow.bf16.pop %v1852
        %v1855 = vmul.bf16 %v1758, 1069105081
        %v1856 = vpow.bf16.pop %v1855
        %v1858 = vmul.bf16 %v1759, 1069105081
        %v1859 = vpow.bf16.pop %v1858
        %v1861 = vmul.bf16 %v1760, 1069105081
        %v1862 = vpow.bf16.pop %v1861
        %v1864 = vmul.bf16 %v1761, 1069105081
        %v1865 = vpow.bf16.pop %v1864
        %v1867 = vmul.bf16 %v1762, 1069105081
        %v1868 = vpow.bf16.pop %v1867
        %v1870 = vmul.bf16 %v1763, 1069105081
        %v1871 = vpow.bf16.pop %v1870
        %v1873 = vmul.bf16 %v1764, 1069105081
        %v1874 = vpow.bf16.pop %v1873
        %v1876 = vmul.bf16 %v1765, 1069105081
        %v1877 = vpow.bf16.pop %v1876
        %v1879 = vmul.bf16 %v1766, 1069105081
        %v1880 = vpow.bf16.pop %v1879
        %v1882 = vmul.bf16 %v1767, 1069105081
        %v1883 = vpow.bf16.pop %v1882
        %v1885 = vmul.bf16 %v1768, 1069105081
        %v1886 = vpow.bf16.pop %v1885
        %v1888 = vmul.bf16 %v1769, 1069105081
        %v1889 = vpow.bf16.pop %v1888
        %v1891 = vmul.bf16 %v1770, 1069105081
        %v1892 = vpow.bf16.pop %v1891
        %v1894 = vmul.bf16 %v1771, 1069105081
        %v1895 = vpow.bf16.pop %v1894
        %v1897 = vmul.bf16 %v1772, 1069105081
        %v1898 = vpow.bf16.pop %v1897
        %v1900 = vmul.bf16 %v1773, 1069105081
        %v1901 = vpow.bf16.pop %v1900
        %v1903 = vmul.bf16 %v1774, 1069105081
        %v1904 = vpow.bf16.pop %v1903
        %v1906 = vmul.bf16 %v1775, 1069105081
        %v1907 = vpow.bf16.pop %v1906
        %v1909 = vmul.bf16 %v1776, 1069105081
        %v1910 = vpow.bf16.pop %v1909
        %v1912 = vmul.bf16 %v1777, 1069105081
        %v1913 = vpow.bf16.pop %v1912
        %v1915 = vmul.bf16 %v1778, 1069105081
        %v1916 = vpow.bf16.pop %v1915
        %v1918 = vmul.bf16 %v1779, 1069105081
        %v1919 = vpow.bf16.pop %v1918
        %v1921 = vmul.bf16 %v1780, 1069105081
        %v1922 = vpow.bf16.pop %v1921
        %v1924 = vmul.bf16 %v1781, 1069105081
        %v1925 = vpow.bf16.pop %v1924
        %v1927 = vmul.bf16 %v1782, 1069105081
        %v1928 = vpow.bf16.pop %v1927
        %v1930 = vmul.bf16 %v1783, 1069105081
        %v1931 = vpow.bf16.pop %v1930
        %v1933 = vmul.bf16 %v1784, 1069105081
        %v1934 = vpow.bf16.pop %v1933
        %v1936 = vmul.bf16 %v1785, 1069105081
        %v1937 = vpow.bf16.pop %v1936
        %v1939 = vmul.bf16 %v1786, 1069105081
        %v1940 = vpow.bf16.pop %v1939
        %v1942 = vmul.bf16 %v1787, 1069105081
        %v1943 = vpow.bf16.pop %v1942
        %v1945 = vmul.bf16 %v1788, 1069105081
        %v1946 = vpow.bf16.pop %v1945
        %v1948 = vmul.bf16 %v1789, 1069105081
        %v1949 = vpow.bf16.pop %v1948
        %v1951 = vmul.bf16 %v1790, 1069105081
        %v1952 = vpow.bf16.pop %v1951
        %v1954 = vmul.bf16 %v1791, 1069105081
        %v1955 = vpow.bf16.pop %v1954
        %v1957 = vmul.bf16 %v1792, 1069105081
        %v1958 = vpow.bf16.pop %v1957
        %v1960 = vmul.bf16 %v1793, 1069105081
        %v1961 = vpow.bf16.pop %v1960
        %v1963 = vmul.bf16 %v1794, 1069105081
        %v1964 = vpow.bf16.pop %v1963
        %v1966 = vmul.bf16 %v1795, 1069105081
        %v1967 = vpow.bf16.pop %v1966
        %v1969 = vmul.bf16 %v1796, 1069105081
        %v1970 = vpow.bf16.pop %v1969
        %v1972 = vmul.bf16 %v1797, 1069105081
        %v1973 = vpow.bf16.pop %v1972
        %v1975 = vmul.bf16 %v1798, 1069105081
        %v1976 = vpow.bf16.pop %v1975
        %v1978 = vmul.bf16 %v1799, 1069105081
        %v1979 = vpow.bf16.pop %v1978
        %v1981 = vmul.bf16 %v1800, 1069105081
        %v1982 = vpow.bf16.pop %v1981
        %v1984 = vmul.bf16 %v1801, 1069105081
        %v1985 = vpow.bf16.pop %v1984
        %v1987 = vmul.bf16 %v1802, 1069105081
        %v1988 = vpow.bf16.pop %v1987
        %v1990 = vmul.bf16 %v1803, 1069105081
        %v1991 = vpow.bf16.pop %v1990
        %v1993 = vmul.bf16 %v1804, 1069105081
        %v1994 = vpow.bf16.pop %v1993
        %v1996 = vmul.bf16 %v1805, 1069105081
        %v1997 = vpow.bf16.pop %v1996
        %1998 = vmatprep.subr.bf16.mxu0 %v1811
        %1999 = vmatpush1.bf16.xpose.msra.mxu0 %v1808
        %2000 = vmatprep.subr.bf16.mxu0 %v1823
        %2001 = vmatpush1.bf16.xpose.msra.mxu0 %v1820
        %2002 = vmatprep.subr.bf16.mxu0 %v1835
        %2003 = vmatpush1.bf16.xpose.msra.mxu0 %v1832
        %2004 = vmatprep.subr.bf16.mxu0 %v1847
        %2005 = vmatpush1.bf16.xpose.msra.mxu0 %v1844
        %2006 = vmatprep.subr.bf16.mxu0 %v1859
        %2007 = vmatpush1.bf16.xpose.msra.mxu0 %v1856
        %2008 = vmatprep.subr.bf16.mxu0 %v1871
        %2009 = vmatpush1.bf16.xpose.msra.mxu0 %v1868
        %2010 = vmatprep.subr.bf16.mxu0 %v1883
        %2011 = vmatpush1.bf16.xpose.msra.mxu0 %v1880
        %2012 = vmatprep.subr.bf16.mxu0 %v1895
        %2013 = vmatpush1.bf16.xpose.msra.mxu0 %v1892
        %2014 = vmatprep.subr.bf16.mxu0 %v1907
        %2015 = vmatpush1.bf16.xpose.msra.mxu0 %v1904
        %2016 = vmatprep.subr.bf16.mxu0 %v1919
        %2017 = vmatpush1.bf16.xpose.msra.mxu0 %v1916
        %2018 = vmatprep.subr.bf16.mxu0 %v1931
        %2019 = vmatpush1.bf16.xpose.msra.mxu0 %v1928
        %2020 = vmatprep.subr.bf16.mxu0 %v1943
        %2021 = vmatpush1.bf16.xpose.msra.mxu0 %v1940
        %2022 = vmatprep.subr.bf16.mxu0 %v1955
        %2023 = vmatpush1.bf16.xpose.msra.mxu0 %v1952
        %2024 = vmatprep.subr.bf16.mxu0 %v1967
        %2025 = vmatpush1.bf16.xpose.msra.mxu0 %v1964
        %2026 = vmatprep.subr.bf16.mxu0 %v1979
        %2027 = vmatpush1.bf16.xpose.msra.mxu0 %v1976
        %2028 = vmatprep.subr.bf16.mxu0 %v1991
        %2029 = vmatpush1.bf16.xpose.msra.mxu0 %v1988
        %2030 = vmatprep.mubr.bf16.mxu0 1065369472
        %2031 = vmatmul.mubr.bf16.gmra.mrb[0].mxu0 1065369472
        %v2032 = vpop.f32.mrb[0].mxu0
        %v2033 = vadd.f32 0.0, %v2032
        %v2034 = vpop.f32.mrb[0].mxu0
        %v2035 = vadd.f32 0.0, %v2034
        %v2036 = vpop.f32.mrb[0].mxu0
        %v2037 = vpop.f32.mrb[0].mxu0
        %2038 = vdwg.mxu0
        %2039 = vmatprep.subr.bf16.mxu0 %v1817
        %2040 = vmatpush1.bf16.xpose.msra.mxu0 %v1814
        %2041 = vmatprep.subr.bf16.mxu0 %v1829
        %2042 = vmatpush1.bf16.xpose.msra.mxu0 %v1826
        %2043 = vmatprep.subr.bf16.mxu0 %v1841
        %2044 = vmatpush1.bf16.xpose.msra.mxu0 %v1838
        %2045 = vmatprep.subr.bf16.mxu0 %v1853
        %2046 = vmatpush1.bf16.xpose.msra.mxu0 %v1850
        %2047 = vmatprep.subr.bf16.mxu0 %v1865
        %2048 = vmatpush1.bf16.xpose.msra.mxu0 %v1862
        %2049 = vmatprep.subr.bf16.mxu0 %v1877
        %2050 = vmatpush1.bf16.xpose.msra.mxu0 %v1874
        %2051 = vmatprep.subr.bf16.mxu0 %v1889
        %2052 = vmatpush1.bf16.xpose.msra.mxu0 %v1886
        %2053 = vmatprep.subr.bf16.mxu0 %v1901
        %2054 = vmatpush1.bf16.xpose.msra.mxu0 %v1898
        %2055 = vmatprep.subr.bf16.mxu0 %v1913
        %2056 = vmatpush1.bf16.xpose.msra.mxu0 %v1910
        %2057 = vmatprep.subr.bf16.mxu0 %v1925
        %2058 = vmatpush1.bf16.xpose.msra.mxu0 %v1922
        %2059 = vmatprep.subr.bf16.mxu0 %v1937
        %2060 = vmatpush1.bf16.xpose.msra.mxu0 %v1934
        %2061 = vmatprep.subr.bf16.mxu0 %v1949
        %2062 = vmatpush1.bf16.xpose.msra.mxu0 %v1946
        %2063 = vmatprep.subr.bf16.mxu0 %v1961
        %2064 = vmatpush1.bf16.xpose.msra.mxu0 %v1958
        %2065 = vmatprep.subr.bf16.mxu0 %v1973
        %2066 = vmatpush1.bf16.xpose.msra.mxu0 %v1970
        %2067 = vmatprep.subr.bf16.mxu0 %v1985
        %2068 = vmatpush1.bf16.xpose.msra.mxu0 %v1982
        %2069 = vmatprep.subr.bf16.mxu0 %v1997
        %2070 = vmatpush1.bf16.xpose.msra.mxu0 %v1994
        %2071 = vmatprep.mubr.bf16.mxu0 1065369472
        %2072 = vmatmul.mubr.bf16.gmra.mrb[0].mxu0 1065369472
        %v2073 = vpop.f32.mrb[0].mxu0
        %v2074 = vadd.f32 %v2033, %v2073
        %v2075 = vpop.f32.mrb[0].mxu0
        %v2076 = vadd.f32 %v2035, %v2075
        %v2077 = vpop.f32.mrb[0].mxu0
        %v2078 = vpop.f32.mrb[0].mxu0
        %2079 = vdwg.mxu0
        %2080 = vmatprep.subr.bf16.mxu0 %v1811
        %2081 = vmatpush1.bf16.xpose.msra.mxu0 %v1808
        %2082 = vmatprep.subr.bf16.mxu0 %v1823
        %2083 = vmatpush1.bf16.xpose.msra.mxu0 %v1820
        %2084 = vmatprep.subr.bf16.mxu0 %v1835
        %2085 = vmatpush1.bf16.xpose.msra.mxu0 %v1832
        %2086 = vmatprep.subr.bf16.mxu0 %v1847
        %2087 = vmatpush1.bf16.xpose.msra.mxu0 %v1844
        %2088 = vmatprep.subr.bf16.mxu0 %v1859
        %2089 = vmatpush1.bf16.xpose.msra.mxu0 %v1856
        %2090 = vmatprep.subr.bf16.mxu0 %v1871
        %2091 = vmatpush1.bf16.xpose.msra.mxu0 %v1868
        %2092 = vmatprep.subr.bf16.mxu0 %v1883
        %2093 = vmatpush1.bf16.xpose.msra.mxu0 %v1880
        %2094 = vmatprep.subr.bf16.mxu0 %v1895
        %2095 = vmatpush1.bf16.xpose.msra.mxu0 %v1892
        %2096 = vmatprep.subr.bf16.mxu0 %v1907
        %2097 = vmatpush1.bf16.xpose.msra.mxu0 %v1904
        %2098 = vmatprep.subr.bf16.mxu0 %v1919
        %2099 = vmatpush1.bf16.xpose.msra.mxu0 %v1916
        %2100 = vmatprep.subr.bf16.mxu0 %v1931
        %2101 = vmatpush1.bf16.xpose.msra.mxu0 %v1928
        %2102 = vmatprep.subr.bf16.mxu0 %v1943
        %2103 = vmatpush1.bf16.xpose.msra.mxu0 %v1940
        %2104 = vmatprep.subr.bf16.mxu0 %v1955
        %2105 = vmatpush1.bf16.xpose.msra.mxu0 %v1952
        %2106 = vmatprep.subr.bf16.mxu0 %v1967
        %2107 = vmatpush1.bf16.xpose.msra.mxu0 %v1964
        %2108 = vmatprep.subr.bf16.mxu0 %v1979
        %2109 = vmatpush1.bf16.xpose.msra.mxu0 %v1976
        %2110 = vmatprep.subr.bf16.mxu0 %v1991
        %2111 = vmatpush1.bf16.xpose.msra.mxu0 %v1988
        %2112 = vmatprep.mubr.bf16.mxu0 %v908
        %2113 = vmatmul.mubr.bf16.gmra.mrb[0].mxu0 %v907
        %v2114 = vpop.f32.mrb[0].mxu0
        %v2115 = vadd.f32 0.0, %v2114
        %v2116 = vpop.f32.mrb[0].mxu0
        %v2117 = vadd.f32 0.0, %v2116
        %v2118 = vpop.f32.mrb[0].mxu0
        %v2119 = vadd.f32 0.0, %v2118
        %v2120 = vpop.f32.mrb[0].mxu0
        %v2121 = vadd.f32 0.0, %v2120
        %2122 = vmatprep.mubr.bf16.mxu0 %v912
        %2123 = vmatmul.mubr.bf16.gmra.mrb[0].mxu0 %v911
        %v2124 = vpop.f32.mrb[0].mxu0
        %v2125 = vadd.f32 0.0, %v2124
        %v2126 = vpop.f32.mrb[0].mxu0
        %v2127 = vadd.f32 0.0, %v2126
        %v2128 = vpop.f32.mrb[0].mxu0
        %v2129 = vadd.f32 0.0, %v2128
        %v2130 = vpop.f32.mrb[0].mxu0
        %v2131 = vadd.f32 0.0, %v2130
        %2132 = vmatprep.mubr.bf16.mxu0 %v916
        %2133 = vmatmul.mubr.bf16.gmra.mrb[0].mxu0 %v915
        %v2134 = vpop.f32.mrb[0].mxu0
        %v2135 = vadd.f32 0.0, %v2134
        %v2136 = vpop.f32.mrb[0].mxu0
        %v2137 = vadd.f32 0.0, %v2136
        %v2138 = vpop.f32.mrb[0].mxu0
        %v2139 = vadd.f32 0.0, %v2138
        %v2140 = vpop.f32.mrb[0].mxu0
        %v2141 = vadd.f32 0.0, %v2140
        %2142 = vmatprep.mubr.bf16.mxu0 %v920
        %2143 = vmatmul.mubr.bf16.gmra.mrb[0].mxu0 %v919
        %v2144 = vpop.f32.mrb[0].mxu0
        %v2145 = vadd.f32 0.0, %v2144
        %v2146 = vpop.f32.mrb[0].mxu0
        %v2147 = vadd.f32 0.0, %v2146
        %v2148 = vpop.f32.mrb[0].mxu0
        %v2149 = vadd.f32 0.0, %v2148
        %v2150 = vpop.f32.mrb[0].mxu0
        %v2151 = vadd.f32 0.0, %v2150
        %2152 = vmatprep.mubr.bf16.mxu0 %v924
        %2153 = vmatmul.mubr.bf16.gmra.mrb[0].mxu0 %v923
        %v2154 = vpop.f32.mrb[0].mxu0
        %v2155 = vadd.f32 0.0, %v2154
        %v2156 = vpop.f32.mrb[0].mxu0
        %v2157 = vadd.f32 0.0, %v2156
        %v2158 = vpop.f32.mrb[0].mxu0
        %v2159 = vadd.f32 0.0, %v2158
        %v2160 = vpop.f32.mrb[0].mxu0
        %v2161 = vadd.f32 0.0, %v2160
        %2162 = vmatprep.mubr.bf16.mxu0 %v928
        %2163 = vmatmul.mubr.bf16.gmra.mrb[0].mxu0 %v927
        %v2164 = vpop.f32.mrb[0].mxu0
        %v2165 = vadd.f32 0.0, %v2164
        %v2166 = vpop.f32.mrb[0].mxu0
        %v2167 = vadd.f32 0.0, %v2166
        %v2168 = vpop.f32.mrb[0].mxu0
        %v2169 = vadd.f32 0.0, %v2168
        %v2170 = vpop.f32.mrb[0].mxu0
        %v2171 = vadd.f32 0.0, %v2170
        %2172 = vmatprep.mubr.bf16.mxu0 %v932
        %2173 = vmatmul.mubr.bf16.gmra.mrb[0].mxu0 %v931
        %v2174 = vpop.f32.mrb[0].mxu0
        %v2175 = vadd.f32 0.0, %v2174
        %v2176 = vpop.f32.mrb[0].mxu0
        %v2177 = vadd.f32 0.0, %v2176
        %v2178 = vpop.f32.mrb[0].mxu0
        %v2179 = vadd.f32 0.0, %v2178
        %v2180 = vpop.f32.mrb[0].mxu0
        %v2181 = vadd.f32 0.0, %v2180
        %2182 = vmatprep.mubr.bf16.mxu0 %v936
        %2183 = vmatmul.mubr.bf16.gmra.mrb[0].mxu0 %v935
        %v2184 = vpop.f32.mrb[0].mxu0
        %v2185 = vadd.f32 0.0, %v2184
        %v2186 = vpop.f32.mrb[0].mxu0
        %v2187 = vadd.f32 0.0, %v2186
        %v2188 = vpop.f32.mrb[0].mxu0
        %v2189 = vadd.f32 0.0, %v2188
        %v2190 = vpop.f32.mrb[0].mxu0
        %v2191 = vadd.f32 0.0, %v2190
        %2192 = vdwg.mxu0
        %2193 = vmatprep.subr.bf16.mxu0 %v1817
        %2194 = vmatpush1.bf16.xpose.msra.mxu0 %v1814
        %2195 = vmatprep.subr.bf16.mxu0 %v1829
        %2196 = vmatpush1.bf16.xpose.msra.mxu0 %v1826
        %2197 = vmatprep.subr.bf16.mxu0 %v1841
        %2198 = vmatpush1.bf16.xpose.msra.mxu0 %v1838
        %2199 = vmatprep.subr.bf16.mxu0 %v1853
        %2200 = vmatpush1.bf16.xpose.msra.mxu0 %v1850
        %2201 = vmatprep.subr.bf16.mxu0 %v1865
        %2202 = vmatpush1.bf16.xpose.msra.mxu0 %v1862
        %2203 = vmatprep.subr.bf16.mxu0 %v1877
        %2204 = vmatpush1.bf16.xpose.msra.mxu0 %v1874
        %2205 = vmatprep.subr.bf16.mxu0 %v1889
        %2206 = vmatpush1.bf16.xpose.msra.mxu0 %v1886
        %2207 = vmatprep.subr.bf16.mxu0 %v1901
        %2208 = vmatpush1.bf16.xpose.msra.mxu0 %v1898
        %2209 = vmatprep.subr.bf16.mxu0 %v1913
        %2210 = vmatpush1.bf16.xpose.msra.mxu0 %v1910
        %2211 = vmatprep.subr.bf16.mxu0 %v1925
        %2212 = vmatpush1.bf16.xpose.msra.mxu0 %v1922
        %2213 = vmatprep.subr.bf16.mxu0 %v1937
        %2214 = vmatpush1.bf16.xpose.msra.mxu0 %v1934
        %2215 = vmatprep.subr.bf16.mxu0 %v1949
        %2216 = vmatpush1.bf16.xpose.msra.mxu0 %v1946
        %2217 = vmatprep.subr.bf16.mxu0 %v1961
        %2218 = vmatpush1.bf16.xpose.msra.mxu0 %v1958
        %2219 = vmatprep.subr.bf16.mxu0 %v1973
        %2220 = vmatpush1.bf16.xpose.msra.mxu0 %v1970
        %2221 = vmatprep.subr.bf16.mxu0 %v1985
        %2222 = vmatpush1.bf16.xpose.msra.mxu0 %v1982
        %2223 = vmatprep.subr.bf16.mxu0 %v1997
        %2224 = vmatpush1.bf16.xpose.msra.mxu0 %v1994
        %2225 = vmatprep.mubr.bf16.mxu0 %v910
        %2226 = vmatmul.mubr.bf16.gmra.mrb[0].mxu0 %v909
        %v2227 = vpop.f32.mrb[0].mxu0
        %v2228 = vadd.f32 %v2115, %v2227
        %v2229 = vpop.f32.mrb[0].mxu0
        %v2230 = vadd.f32 %v2117, %v2229
        %v2231 = vpop.f32.mrb[0].mxu0
        %v2232 = vadd.f32 %v2119, %v2231
        %v2233 = vpop.f32.mrb[0].mxu0
        %v2234 = vadd.f32 %v2121, %v2233
        %2235 = vmatprep.mubr.bf16.mxu0 %v914
        %2236 = vmatmul.mubr.bf16.gmra.mrb[0].mxu0 %v913
        %v2237 = vpop.f32.mrb[0].mxu0
        %v2238 = vadd.f32 %v2125, %v2237
        %v2239 = vpop.f32.mrb[0].mxu0
        %v2240 = vadd.f32 %v2127, %v2239
        %v2241 = vpop.f32.mrb[0].mxu0
        %v2242 = vadd.f32 %v2129, %v2241
        %v2243 = vpop.f32.mrb[0].mxu0
        %v2244 = vadd.f32 %v2131, %v2243
        %2245 = vmatprep.mubr.bf16.mxu0 %v918
        %2246 = vmatmul.mubr.bf16.gmra.mrb[0].mxu0 %v917
        %v2247 = vpop.f32.mrb[0].mxu0
        %v2248 = vadd.f32 %v2135, %v2247
        %v2249 = vpop.f32.mrb[0].mxu0
        %v2250 = vadd.f32 %v2137, %v2249
        %v2251 = vpop.f32.mrb[0].mxu0
        %v2252 = vadd.f32 %v2139, %v2251
        %v2253 = vpop.f32.mrb[0].mxu0
        %v2254 = vadd.f32 %v2141, %v2253
        %2255 = vmatprep.mubr.bf16.mxu0 %v922
        %2256 = vmatmul.mubr.bf16.gmra.mrb[0].mxu0 %v921
        %v2257 = vpop.f32.mrb[0].mxu0
        %v2258 = vadd.f32 %v2145, %v2257
        %v2259 = vpop.f32.mrb[0].mxu0
        %v2260 = vadd.f32 %v2147, %v2259
        %v2261 = vpop.f32.mrb[0].mxu0
        %v2262 = vadd.f32 %v2149, %v2261
        %v2263 = vpop.f32.mrb[0].mxu0
        %v2264 = vadd.f32 %v2151, %v2263
        %2265 = vmatprep.mubr.bf16.mxu0 %v926
        %2266 = vmatmul.mubr.bf16.gmra.mrb[0].mxu0 %v925
        %v2267 = vpop.f32.mrb[0].mxu0
        %v2268 = vadd.f32 %v2155, %v2267
        %v2269 = vpop.f32.mrb[0].mxu0
        %v2270 = vadd.f32 %v2157, %v2269
        %v2271 = vpop.f32.mrb[0].mxu0
        %v2272 = vadd.f32 %v2159, %v2271
        %v2273 = vpop.f32.mrb[0].mxu0
        %v2274 = vadd.f32 %v2161, %v2273
        %2275 = vmatprep.mubr.bf16.mxu0 %v930
        %2276 = vmatmul.mubr.bf16.gmra.mrb[0].mxu0 %v929
        %v2277 = vpop.f32.mrb[0].mxu0
        %v2278 = vadd.f32 %v2165, %v2277
        %v2279 = vpop.f32.mrb[0].mxu0
        %v2280 = vadd.f32 %v2167, %v2279
        %v2281 = vpop.f32.mrb[0].mxu0
        %v2282 = vadd.f32 %v2169, %v2281
        %v2283 = vpop.f32.mrb[0].mxu0
        %v2284 = vadd.f32 %v2171, %v2283
        %2285 = vmatprep.mubr.bf16.mxu0 %v934
        %2286 = vmatmul.mubr.bf16.gmra.mrb[0].mxu0 %v933
        %v2287 = vpop.f32.mrb[0].mxu0
        %v2288 = vadd.f32 %v2175, %v2287
        %v2289 = vpop.f32.mrb[0].mxu0
        %v2290 = vadd.f32 %v2177, %v2289
        %v2291 = vpop.f32.mrb[0].mxu0
        %v2292 = vadd.f32 %v2179, %v2291
        %v2293 = vpop.f32.mrb[0].mxu0
        %v2294 = vadd.f32 %v2181, %v2293
        %2295 = vmatprep.mubr.bf16.mxu0 %v938
        %2296 = vmatmul.mubr.bf16.gmra.mrb[0].mxu0 %v937
        %v2297 = vpop.f32.mrb[0].mxu0
        %v2298 = vadd.f32 %v2185, %v2297
        %v2299 = vpop.f32.mrb[0].mxu0
        %v2300 = vadd.f32 %v2187, %v2299
        %v2301 = vpop.f32.mrb[0].mxu0
        %v2302 = vadd.f32 %v2189, %v2301
        %v2303 = vpop.f32.mrb[0].mxu0
        %v2304 = vadd.f32 %v2191, %v2303
        %2305 = vdwg.mxu0
        %s2306 = sld [smem:[#allocation3]]
        %v2307 = vrcp.pop %v2074
        %v2308 = vrcp.pop %v2076
        %v2309 = vstv %s2306
        %v2310 = vmul.f32 %v2309, %v2307
        %v2311 = vmul.f32 %v2309, %v2308
        %s2312 = smul.u32 %s22, 256
        %s2313 = sshra.s32 %s2312, 7
        %s2314 = sand.u32 %s2312, 127
        %s2315 = smul.addr %s2313, 8
        %s2316 = scalar_lea.vmem %s259, %s2315
        %v2317 = vld [vmem:[%s2316] sm:$0xff]
        %v2318 = vld [vmem:[%s2316 + $0x8] sm:$0xff]
        %v2319 = vld [vmem:[%s2316 + $0x20] sm:$0xff]
        %v2320 = vld [vmem:[%s2316 + $0x28] sm:$0xff]
        %v2321 = vld [vmem:[%s2316 + $0x40] sm:$0xff]
        %v2322 = vld [vmem:[%s2316 + $0x48] sm:$0xff]
        %v2323 = vld [vmem:[%s2316 + $0x60] sm:$0xff]
        %v2324 = vld [vmem:[%s2316 + $0x68] sm:$0xff]
        %v2325 = vld [vmem:[%s2316 + $0x80] sm:$0xff]
        %v2326 = vld [vmem:[%s2316 + $0x88] sm:$0xff]
        %v2327 = vld [vmem:[%s2316 + $0xa0] sm:$0xff]
        %v2328 = vld [vmem:[%s2316 + $0xa8] sm:$0xff]
        %v2329 = vld [vmem:[%s2316 + $0xc0] sm:$0xff]
        %v2330 = vld [vmem:[%s2316 + $0xc8] sm:$0xff]
        %v2331 = vld [vmem:[%s2316 + $0xe0] sm:$0xff]
        %v2332 = vld [vmem:[%s2316 + $0xe8] sm:$0xff]
        %v2333 = vld [vmem:[%s2316 + $0x100] sm:$0xff]
        %v2334 = vld [vmem:[%s2316 + $0x108] sm:$0xff]
        %v2335 = vld [vmem:[%s2316 + $0x120] sm:$0xff]
        %v2336 = vld [vmem:[%s2316 + $0x128] sm:$0xff]
        %v2337 = vld [vmem:[%s2316 + $0x140] sm:$0xff]
        %v2338 = vld [vmem:[%s2316 + $0x148] sm:$0xff]
        %v2339 = vld [vmem:[%s2316 + $0x160] sm:$0xff]
        %v2340 = vld [vmem:[%s2316 + $0x168] sm:$0xff]
        %v2341 = vld [vmem:[%s2316 + $0x180] sm:$0xff]
        %v2342 = vld [vmem:[%s2316 + $0x188] sm:$0xff]
        %v2343 = vld [vmem:[%s2316 + $0x1a0] sm:$0xff]
        %v2344 = vld [vmem:[%s2316 + $0x1a8] sm:$0xff]
        %v2345 = vld [vmem:[%s2316 + $0x1c0] sm:$0xff]
        %v2346 = vld [vmem:[%s2316 + $0x1c8] sm:$0xff]
        %v2347 = vld [vmem:[%s2316 + $0x1e0] sm:$0xff]
        %v2348 = vld [vmem:[%s2316 + $0x1e8] sm:$0xff]
        %v2349 = vlaneseq
        %v2350 = vshrl.u32 %v2349, 7
        %v2351 = vsub.s32 0, %v2350
        %v2352 = vrot.slane %v2310, %v2351
        %v2353 = vlaneseq
        %v2354 = vshrl.u32 %v2353, 7
        %v2355 = vsub.s32 0, %v2354
        %v2356 = vrot.slane %v2311, %v2355
        %v2357 = vmul.f32 %v2228, %v2352
        %v2358 = vmul.f32 %v2230, %v2356
        %v2359 = vmul.f32 %v2232, %v2352
        %v2360 = vmul.f32 %v2234, %v2356
        %v2361 = vmul.f32 %v2238, %v2352
        %v2362 = vmul.f32 %v2240, %v2356
        %v2363 = vmul.f32 %v2242, %v2352
        %v2364 = vmul.f32 %v2244, %v2356
        %v2365 = vmul.f32 %v2248, %v2352
        %v2366 = vmul.f32 %v2250, %v2356
        %v2367 = vmul.f32 %v2252, %v2352
        %v2368 = vmul.f32 %v2254, %v2356
        %v2369 = vmul.f32 %v2258, %v2352
        %v2370 = vmul.f32 %v2260, %v2356
        %v2371 = vmul.f32 %v2262, %v2352
        %v2372 = vmul.f32 %v2264, %v2356
        %v2373 = vmul.f32 %v2268, %v2352
        %v2374 = vmul.f32 %v2270, %v2356
        %v2375 = vmul.f32 %v2272, %v2352
        %v2376 = vmul.f32 %v2274, %v2356
        %v2377 = vmul.f32 %v2278, %v2352
        %v2378 = vmul.f32 %v2280, %v2356
        %v2379 = vmul.f32 %v2282, %v2352
        %v2380 = vmul.f32 %v2284, %v2356
        %v2381 = vmul.f32 %v2288, %v2352
        %v2382 = vmul.f32 %v2290, %v2356
        %v2383 = vmul.f32 %v2292, %v2352
        %v2384 = vmul.f32 %v2294, %v2356
        %v2385 = vmul.f32 %v2298, %v2352
        %v2386 = vmul.f32 %v2300, %v2356
        %v2387 = vmul.f32 %v2302, %v2352
        %v2388 = vmul.f32 %v2304, %v2356
        %v2389 = vadd.f32 %v2357, %v2317
        %v2390 = vadd.f32 %v2358, %v2318
        %v2391 = vadd.f32 %v2359, %v2319
        %v2392 = vadd.f32 %v2360, %v2320
        %v2393 = vadd.f32 %v2361, %v2321
        %v2394 = vadd.f32 %v2362, %v2322
        %v2395 = vadd.f32 %v2363, %v2323
        %v2396 = vadd.f32 %v2364, %v2324
        %v2397 = vadd.f32 %v2365, %v2325
        %v2398 = vadd.f32 %v2366, %v2326
        %v2399 = vadd.f32 %v2367, %v2327
        %v2400 = vadd.f32 %v2368, %v2328
        %v2401 = vadd.f32 %v2369, %v2329
        %v2402 = vadd.f32 %v2370, %v2330
        %v2403 = vadd.f32 %v2371, %v2331
        %v2404 = vadd.f32 %v2372, %v2332
        %v2405 = vadd.f32 %v2373, %v2333
        %v2406 = vadd.f32 %v2374, %v2334
        %v2407 = vadd.f32 %v2375, %v2335
        %v2408 = vadd.f32 %v2376, %v2336
        %v2409 = vadd.f32 %v2377, %v2337
        %v2410 = vadd.f32 %v2378, %v2338
        %v2411 = vadd.f32 %v2379, %v2339
        %v2412 = vadd.f32 %v2380, %v2340
        %v2413 = vadd.f32 %v2381, %v2341
        %v2414 = vadd.f32 %v2382, %v2342
        %v2415 = vadd.f32 %v2383, %v2343
        %v2416 = vadd.f32 %v2384, %v2344
        %v2417 = vadd.f32 %v2385, %v2345
        %v2418 = vadd.f32 %v2386, %v2346
        %v2419 = vadd.f32 %v2387, %v2347
        %v2420 = vadd.f32 %v2388, %v2348
        %2421 = vst [vmem:[%s254] sm:$0xff] %v2389
        %2422 = vst [vmem:[%s254 + $0x8] sm:$0xff] %v2390
        %2423 = vst [vmem:[%s254 + $0x10] sm:$0xff] %v2391
        %2424 = vst [vmem:[%s254 + $0x18] sm:$0xff] %v2392
        %2425 = vst [vmem:[%s254 + $0x20] sm:$0xff] %v2393
        %2426 = vst [vmem:[%s254 + $0x28] sm:$0xff] %v2394
        %2427 = vst [vmem:[%s254 + $0x30] sm:$0xff] %v2395
        %2428 = vst [vmem:[%s254 + $0x38] sm:$0xff] %v2396
        %2429 = vst [vmem:[%s254 + $0x40] sm:$0xff] %v2397
        %2430 = vst [vmem:[%s254 + $0x48] sm:$0xff] %v2398
        %2431 = vst [vmem:[%s254 + $0x50] sm:$0xff] %v2399
        %2432 = vst [vmem:[%s254 + $0x58] sm:$0xff] %v2400
        %2433 = vst [vmem:[%s254 + $0x60] sm:$0xff] %v2401
        %2434 = vst [vmem:[%s254 + $0x68] sm:$0xff] %v2402
        %2435 = vst [vmem:[%s254 + $0x70] sm:$0xff] %v2403
        %2436 = vst [vmem:[%s254 + $0x78] sm:$0xff] %v2404
        %2437 = vst [vmem:[%s254 + $0x80] sm:$0xff] %v2405
        %2438 = vst [vmem:[%s254 + $0x88] sm:$0xff] %v2406
        %2439 = vst [vmem:[%s254 + $0x90] sm:$0xff] %v2407
        %2440 = vst [vmem:[%s254 + $0x98] sm:$0xff] %v2408
        %2441 = vst [vmem:[%s254 + $0xa0] sm:$0xff] %v2409
        %2442 = vst [vmem:[%s254 + $0xa8] sm:$0xff] %v2410
        %2443 = vst [vmem:[%s254 + $0xb0] sm:$0xff] %v2411
        %2444 = vst [vmem:[%s254 + $0xb8] sm:$0xff] %v2412
        %2445 = vst [vmem:[%s254 + $0xc0] sm:$0xff] %v2413
        %2446 = vst [vmem:[%s254 + $0xc8] sm:$0xff] %v2414
        %2447 = vst [vmem:[%s254 + $0xd0] sm:$0xff] %v2415
        %2448 = vst [vmem:[%s254 + $0xd8] sm:$0xff] %v2416
        %2449 = vst [vmem:[%s254 + $0xe0] sm:$0xff] %v2417
        %2450 = vst [vmem:[%s254 + $0xe8] sm:$0xff] %v2418
        %2451 = vst [vmem:[%s254 + $0xf0] sm:$0xff] %v2419
        %2452 = vst [vmem:[%s254 + $0xf8] sm:$0xff] %v2420
        %s2453 = sand.u32 %s156, 1
        %s2454 = sand.u32 %s156, 1
        %s2455 = smul.addr %s2454, 256
        %s2456 = scalar_lea.vmem [#allocation4], %s2455
        // Predicated region
        $region45: #{self_attention_3d.1} parent=39 // pred_check
          %p2457 = pneg %p166
        $region46: #{self_attention_3d.1} parent=39 // pred_check_branch
          %2459 = sbr.rel (%p2457) target = $region48
        $region47: #{self_attention_3d.1} parent=39 // pred_region
          %s2460 = smul.u32 2, %s22
          %s2461 = smul.addr %s21, 64
          %s2462 = sadd.s32 %s2460, %s2461
          %s2463 = smul.addr %s2462, 8
          %s2464 = scalar_lea.vmem %s5, %s2463
          // Predicated region
          $region49: #{self_attention_3d.1} parent=47 // pred_check
            _
          $region50: #{self_attention_3d.1} parent=47 // pred_check_branch
            %2466 = sbr.rel (0) target = $region52
          $region51: #{self_attention_3d.1} parent=47 // pred_region
            // Predicated region
            $region53: #{self_attention_3d.1} parent=51 // pred_check
              _
            $region54: #{self_attention_3d.1} parent=51 // pred_check_branch
              %2468 = sbr.rel (0) target = $region56
            $region55: #{self_attention_3d.1} parent=51 // pred_region
              loop: start=0, step=1, limit=1
              $region57: #{self_attention_3d.1} parent=55 // loop_pre_header
                _
              $region58: #{self_attention_3d.1} parent=55 // loop_header
                %s2470 = sphi 0, %s2474
                %p2471 = scmp.ge.s32.totalorder %s2470, 1
                %s2475 = sphi %s2456, %s2456
                %s2476 = sphi %s2464, %s2464
              $region59: #{self_attention_3d.1} parent=55 // loop_header_branch
                %2473 = sbr.rel (%p2471) target = $region63
              $region60: #{self_attention_3d.1} parent=55 // loop_body
                %v2477 = vld [vmem:[%s2475] sm:$0xff]
                %2478 = vst [vmem:[%s2476] sm:$0xff] %v2477
                %v2479 = vld [vmem:[%s2475 + $0x8] sm:$0xff]
                %2480 = vst [vmem:[%s2476 + $0x8] sm:$0xff] %v2479
                %v2481 = vld [vmem:[%s2475 + $0x10] sm:$0xff]
                %2482 = vst [vmem:[%s2476 + $0x20] sm:$0xff] %v2481
                %v2483 = vld [vmem:[%s2475 + $0x18] sm:$0xff]
                %2484 = vst [vmem:[%s2476 + $0x28] sm:$0xff] %v2483
                %v2485 = vld [vmem:[%s2475 + $0x20] sm:$0xff]
                %2486 = vst [vmem:[%s2476 + $0x40] sm:$0xff] %v2485
                %v2487 = vld [vmem:[%s2475 + $0x28] sm:$0xff]
                %2488 = vst [vmem:[%s2476 + $0x48] sm:$0xff] %v2487
                %v2489 = vld [vmem:[%s2475 + $0x30] sm:$0xff]
                %2490 = vst [vmem:[%s2476 + $0x60] sm:$0xff] %v2489
                %v2491 = vld [vmem:[%s2475 + $0x38] sm:$0xff]
                %2492 = vst [vmem:[%s2476 + $0x68] sm:$0xff] %v2491
                %v2493 = vld [vmem:[%s2475 + $0x40] sm:$0xff]
                %2494 = vst [vmem:[%s2476 + $0x80] sm:$0xff] %v2493
                %v2495 = vld [vmem:[%s2475 + $0x48] sm:$0xff]
                %2496 = vst [vmem:[%s2476 + $0x88] sm:$0xff] %v2495
                %v2497 = vld [vmem:[%s2475 + $0x50] sm:$0xff]
                %2498 = vst [vmem:[%s2476 + $0xa0] sm:$0xff] %v2497
                %v2499 = vld [vmem:[%s2475 + $0x58] sm:$0xff]
                %2500 = vst [vmem:[%s2476 + $0xa8] sm:$0xff] %v2499
                %v2501 = vld [vmem:[%s2475 + $0x60] sm:$0xff]
                %2502 = vst [vmem:[%s2476 + $0xc0] sm:$0xff] %v2501
                %v2503 = vld [vmem:[%s2475 + $0x68] sm:$0xff]
                %2504 = vst [vmem:[%s2476 + $0xc8] sm:$0xff] %v2503
                %v2505 = vld [vmem:[%s2475 + $0x70] sm:$0xff]
                %2506 = vst [vmem:[%s2476 + $0xe0] sm:$0xff] %v2505
                %v2507 = vld [vmem:[%s2475 + $0x78] sm:$0xff]
                %2508 = vst [vmem:[%s2476 + $0xe8] sm:$0xff] %v2507
                %v2509 = vld [vmem:[%s2475 + $0x80] sm:$0xff]
                %2510 = vst [vmem:[%s2476 + $0x100] sm:$0xff] %v2509
                %v2511 = vld [vmem:[%s2475 + $0x88] sm:$0xff]
                %2512 = vst [vmem:[%s2476 + $0x108] sm:$0xff] %v2511
                %v2513 = vld [vmem:[%s2475 + $0x90] sm:$0xff]
                %2514 = vst [vmem:[%s2476 + $0x120] sm:$0xff] %v2513
                %v2515 = vld [vmem:[%s2475 + $0x98] sm:$0xff]
                %2516 = vst [vmem:[%s2476 + $0x128] sm:$0xff] %v2515
                %v2517 = vld [vmem:[%s2475 + $0xa0] sm:$0xff]
                %2518 = vst [vmem:[%s2476 + $0x140] sm:$0xff] %v2517
                %v2519 = vld [vmem:[%s2475 + $0xa8] sm:$0xff]
                %2520 = vst [vmem:[%s2476 + $0x148] sm:$0xff] %v2519
                %v2521 = vld [vmem:[%s2475 + $0xb0] sm:$0xff]
                %2522 = vst [vmem:[%s2476 + $0x160] sm:$0xff] %v2521
                %v2523 = vld [vmem:[%s2475 + $0xb8] sm:$0xff]
                %2524 = vst [vmem:[%s2476 + $0x168] sm:$0xff] %v2523
                %v2525 = vld [vmem:[%s2475 + $0xc0] sm:$0xff]
                %2526 = vst [vmem:[%s2476 + $0x180] sm:$0xff] %v2525
                %v2527 = vld [vmem:[%s2475 + $0xc8] sm:$0xff]
                %2528 = vst [vmem:[%s2476 + $0x188] sm:$0xff] %v2527
                %v2529 = vld [vmem:[%s2475 + $0xd0] sm:$0xff]
                %2530 = vst [vmem:[%s2476 + $0x1a0] sm:$0xff] %v2529
                %v2531 = vld [vmem:[%s2475 + $0xd8] sm:$0xff]
                %2532 = vst [vmem:[%s2476 + $0x1a8] sm:$0xff] %v2531
                %v2533 = vld [vmem:[%s2475 + $0xe0] sm:$0xff]
                %2534 = vst [vmem:[%s2476 + $0x1c0] sm:$0xff] %v2533
                %v2535 = vld [vmem:[%s2475 + $0xe8] sm:$0xff]
                %2536 = vst [vmem:[%s2476 + $0x1c8] sm:$0xff] %v2535
                %v2537 = vld [vmem:[%s2475 + $0xf0] sm:$0xff]
                %2538 = vst [vmem:[%s2476 + $0x1e0] sm:$0xff] %v2537
                %v2539 = vld [vmem:[%s2475 + $0xf8] sm:$0xff]
                %2540 = vst [vmem:[%s2476 + $0x1e8] sm:$0xff] %v2539
              $region61: #{self_attention_3d.1} parent=55 // loop_footer
                %s2474 = sadd.s32 1, %s2470
              $region62: #{self_attention_3d.1} parent=55 // loop_footer_branch
                %2469 = sbr.rel target = $region58
              $region63: #{self_attention_3d.1} parent=55 // loop_exit
                _
            $region56: #{self_attention_3d.1} parent=51 // pred_fallthru
              _
            // Predicated region
            $region64: #{self_attention_3d.1} parent=51 // pred_check
              _
            $region65: #{self_attention_3d.1} parent=51 // pred_check_branch
              %2542 = sbr.rel target = $region67
            $region66: #{self_attention_3d.1} parent=51 // pred_region
              _
            $region67: #{self_attention_3d.1} parent=51 // pred_fallthru
              _
          $region52: #{self_attention_3d.1} parent=47 // pred_fallthru
            _
          %2543 = vnop
        $region48: #{self_attention_3d.1} parent=39 // pred_fallthru
          _
      $region40: #{self_attention_3d.1} parent=5 // pred_fallthru
        _
      %p2544 = scmp.le.s32.totalorder 2, %s12
      // Predicated region
      $region68: #{self_attention_3d.1} parent=5 // pred_check
        %p2545 = pneg %p2544
      $region69: #{self_attention_3d.1} parent=5 // pred_check_branch
        %2547 = sbr.rel (%p2545) target = $region71
      $region70: #{self_attention_3d.1} parent=5 // pred_region
        %s2548 = ssub.s32 %s12, 2
        // Predicated region
        $region72: #{self_attention_3d.1} parent=70 // pred_check
          %p2549 = pneg %p172
        $region73: #{self_attention_3d.1} parent=70 // pred_check_branch
          %2551 = sbr.rel (%p2549) target = $region75
        $region74: #{self_attention_3d.1} parent=70 // pred_region
          %s2552 = sand.u32 %s157, 1
          %s2553 = sand.u32 %s157, 1
          %s2554 = smul.addr %s2553, 256
          %s2555 = scalar_lea.vmem [#allocation4], %s2554
        $region75: #{self_attention_3d.1} parent=70 // pred_fallthru
          _
      $region71: #{self_attention_3d.1} parent=5 // pred_fallthru
        _
    $region6: #{self_attention_3d.1} parent=1 // loop_footer
      %s16 = sadd.s32 1, %s12
    $region7: #{self_attention_3d.1} parent=1 // loop_footer_branch
      %11 = sbr.rel target = $region3
    $region8: #{self_attention_3d.1} parent=1 // loop_exit
      _

</llo_original>
